<compile_context>
chip_gen: v6e
topology: v6e:2x2x1
jax: 0.10.0
libtpu: 0.0.40
codegen_flags: <defaults>
</compile_context>

<pallas_src>
import jax
import jax.numpy as jnp
from jax.experimental import pallas as pl
from jax.experimental.pallas import tpu as pltpu

HIDDEN = 512  # fixed by the module definition


def _round_up(x, m):
    return ((x + m - 1) // m) * m


def _cdiv(a, b):
    return -(-a // b)


def apgp_kernel(x_ref, w1_ref, b1_ref, w2_ref, b2_ref, w3_ref, b3_ref,
                w4_ref, b4_ref, o_ref):
    # bf16 view of the input tile for the first MXU pass.
    x_bf16 = x_ref[...].astype(jnp.bfloat16)

    h = jnp.dot(x_bf16, w1_ref[...],
                preferred_element_type=jnp.float32) + b1_ref[...]
    h = jnp.maximum(h, 0.0)

    h = jnp.dot(h.astype(jnp.bfloat16), w2_ref[...],
                preferred_element_type=jnp.float32) + b2_ref[...]
    h = jnp.maximum(h, 0.0)

    h = jnp.dot(h.astype(jnp.bfloat16), w3_ref[...],
                preferred_element_type=jnp.float32) + b3_ref[...]
    h = jnp.maximum(h, 0.0)

    out = jnp.dot(h.astype(jnp.bfloat16), w4_ref[...],
                  preferred_element_type=jnp.float32) + b4_ref[...]

    # Residual add: re-read the VMEM ref here (cheap vld) instead of keeping
    # an f32 copy of the tile live across all four matmuls.
    o_ref[...] = (out + x_ref[...]).astype(o_ref.dtype)


def _choose_tiling(B, tb):
    """Pick (TB, Bp, n_steps).

    - pad waste is bounded (~<128 rows per grid step) by deriving TB from the
      step count instead of rounding B up to a fixed TB.
    - for B >= 256 the grid always has >= 2 steps so the "parallel" batch axis
      can shard across both TensorCores on v7x.
    """
    tb = max(128, _round_up(tb, 128))
    if B >= 256:
        n_steps = max(2, _cdiv(B, tb))
    else:
        n_steps = 1
    per_step = _cdiv(B, n_steps)
    align = 128 if per_step >= 128 else 8
    TB = _round_up(per_step, align)
    Bp = n_steps * TB
    return TB, Bp, n_steps


def apgp_forward(x, params, *, tb=1024):
    """x: (B, C) float32. params: dict of (in,out) f32 weights and (1,out) f32
    biases. Returns (B, C) float32 = MLP(x) + x."""
    B, C = x.shape

    # Lane-dense feature padding (C -> multiple of 128) and adaptive batch tiling.
    Cp = _round_up(max(C, 128), 128)
    TB, Bp, n_steps = _choose_tiling(B, tb)
    grid = (n_steps,)

    # Pad x (padded rows/lanes are zero; their outputs are discarded).
    x_p = jnp.pad(x, ((0, Bp - B), (0, Cp - C)))

    # Pad + cast weights. Zero rows of w1 / zero cols of w4 & b4 keep the math
    # identical on the real lanes.
    w1 = jnp.pad(params["w1"], ((0, Cp - C), (0, 0))).astype(jnp.bfloat16)
    w2 = params["w2"].astype(jnp.bfloat16)
    w3 = params["w3"].astype(jnp.bfloat16)
    w4 = jnp.pad(params["w4"], ((0, 0), (0, Cp - C))).astype(jnp.bfloat16)
    b1 = params["b1"]
    b2 = params["b2"]
    b3 = params["b3"]
    b4 = jnp.pad(params["b4"], ((0, 0), (0, Cp - C)))

    # Batch-tiled activation specs; weights/biases have constant index maps
    # and are single-buffered (Buffered(1)) since their block never changes.
    x_spec = pl.BlockSpec((TB, Cp), lambda i: (i, 0))
    o_spec = pl.BlockSpec((TB, Cp), lambda i: (i, 0))
    w1_spec = pl.BlockSpec((Cp, HIDDEN), lambda i: (0, 0),
                           pipeline_mode=pl.Buffered(1))
    wh_spec = pl.BlockSpec((HIDDEN, HIDDEN), lambda i: (0, 0),
                           pipeline_mode=pl.Buffered(1))
    w4_spec = pl.BlockSpec((HIDDEN, Cp), lambda i: (0, 0),
                           pipeline_mode=pl.Buffered(1))
    bh_spec = pl.BlockSpec((1, HIDDEN), lambda i: (0, 0),
                           pipeline_mode=pl.Buffered(1))
    b4_spec = pl.BlockSpec((1, Cp), lambda i: (0, 0),
                           pipeline_mode=pl.Buffered(1))

    flops = 2 * Bp * (Cp * HIDDEN + HIDDEN * HIDDEN * 2 + HIDDEN * Cp)
    weight_bytes = 2 * (Cp * HIDDEN + 2 * HIDDEN * HIDDEN + HIDDEN * Cp)  # bf16
    bias_bytes = 4 * (3 * HIDDEN + Cp)
    io_bytes = 4 * Bp * Cp * 2  # x in + out
    cost = pl.CostEstimate(flops=flops, transcendentals=0,
                           bytes_accessed=weight_bytes + bias_bytes + io_bytes)

    out_p = pl.pallas_call(
        apgp_kernel,
        out_shape=jax.ShapeDtypeStruct((Bp, Cp), x.dtype),
        grid=grid,
        in_specs=[x_spec,
                  w1_spec, bh_spec,
                  wh_spec, bh_spec,
                  wh_spec, bh_spec,
                  w4_spec, b4_spec],
        out_specs=o_spec,
        compiler_params=pltpu.CompilerParams(
            dimension_semantics=("parallel",),
            vmem_limit_bytes=48 * 1024 * 1024),
        cost_estimate=cost,
    )(x_p, w1, b1, w2, b2, w3, b3, w4, b4)

    return out_p[:B, :C]


def init_params(key, num_class):
    """PyTorch-style init: U(-1/sqrt(fan_in), 1/sqrt(fan_in)).
    Weights stored transposed (in, out); biases stored as (1, out)."""
    def linear(k, fan_in, fan_out):
        kw, kb = jax.random.split(k)
        bound = 1.0 / jnp.sqrt(jnp.float32(fan_in))
        w = jax.random.uniform(kw, (fan_in, fan_out), jnp.float32, -bound, bound)
        b = jax.random.uniform(kb, (1, fan_out), jnp.float32, -bound, bound)
        return w, b

    k1, k2, k3, k4 = jax.random.split(key, 4)
    w1, b1 = linear(k1, num_class, HIDDEN)
    w2, b2 = linear(k2, HIDDEN, HIDDEN)
    w3, b3 = linear(k3, HIDDEN, HIDDEN)
    w4, b4 = linear(k4, HIDDEN, num_class)
    return dict(w1=w1, b1=b1, w2=w2, b2=b2, w3=w3, b3=b3, w4=w4, b4=b4)


def apgp_reference(x, p):
    """Pure-JAX reference mirroring the kernel's bf16-weight / f32-accumulate
    numerics."""
    def dot_bf16(a, w):
        return jnp.dot(a.astype(jnp.bfloat16), w.astype(jnp.bfloat16),
                       preferred_element_type=jnp.float32)

    h = jnp.maximum(dot_bf16(x, p["w1"]) + p["b1"], 0.0)
    h = jnp.maximum(dot_bf16(h, p["w2"]) + p["b2"], 0.0)
    h = jnp.maximum(dot_bf16(h, p["w3"]) + p["b3"], 0.0)
    return dot_bf16(h, p["w4"]) + p["b4"] + x


if __name__ == "__main__":
    num_class = 100   # module default -> exercises the C->128 lane padding
    key = jax.random.PRNGKey(0)
    kx, kp, kx2 = jax.random.split(key, 3)
    params = init_params(kp, num_class)

    # Small single-tile case (grid=(1,)).
    batch = 8
    x = jax.random.normal(kx, (batch, num_class), jnp.float32)
    out = jax.block_until_ready(apgp_forward(x, params))
    ref = apgp_reference(x, params)
    assert out.shape == (batch, num_class)
    assert jnp.allclose(out, ref, atol=1e-2, rtol=1e-2), float(
        jnp.max(jnp.abs(out - ref)))

    # Multi-step case (grid >= 2, exercises batch padding + the pipelined /
    # megacore-parallel path) — still small.
    batch2 = 300
    x2 = jax.random.normal(kx2, (batch2, num_class), jnp.float32)
    out2 = jax.block_until_ready(apgp_forward(x2, params, tb=128))
    ref2 = apgp_reference(x2, params)
    assert out2.shape == (batch2, num_class)
    assert jnp.allclose(out2, ref2, atol=1e-2, rtol=1e-2), float(
        jnp.max(jnp.abs(out2 - ref2)))

    print("KERNEL_OK")
</pallas_src>

<mosaic_0001>
module attributes {stable_mosaic.version = 11 : i64} {
  func.func @apgp_kernel(%arg0: i32, %arg1: memref<8x128xf32, #tpu.memory_space<vmem>>, %arg2: memref<128x512xbf16, #tpu.memory_space<vmem>>, %arg3: memref<1x512xf32, #tpu.memory_space<vmem>>, %arg4: memref<512x512xbf16, #tpu.memory_space<vmem>>, %arg5: memref<1x512xf32, #tpu.memory_space<vmem>>, %arg6: memref<512x512xbf16, #tpu.memory_space<vmem>>, %arg7: memref<1x512xf32, #tpu.memory_space<vmem>>, %arg8: memref<512x128xbf16, #tpu.memory_space<vmem>>, %arg9: memref<1x128xf32, #tpu.memory_space<vmem>>, %arg10: memref<8x128xf32, #tpu.memory_space<vmem>>) attributes {dimension_semantics = [#tpu.dimension_semantics<parallel>], iteration_bounds = array<i64: 1>, scalar_prefetch = 0 : i64, scratch_operands = 0 : i64, tpu.core_type = #tpu.core_type<tc>, window_params = [{transform_indices = @transform_0, window_bounds = array<i64: 8, 128>}, {pipeline_mode = #tpu.pipeline_mode<synchronous>, transform_indices = @transform_1, window_bounds = array<i64: 128, 512>}, {pipeline_mode = #tpu.pipeline_mode<synchronous>, transform_indices = @transform_2, window_bounds = array<i64: 1, 512>}, {pipeline_mode = #tpu.pipeline_mode<synchronous>, transform_indices = @transform_3, window_bounds = array<i64: 512, 512>}, {pipeline_mode = #tpu.pipeline_mode<synchronous>, transform_indices = @transform_4, window_bounds = array<i64: 1, 512>}, {pipeline_mode = #tpu.pipeline_mode<synchronous>, transform_indices = @transform_5, window_bounds = array<i64: 512, 512>}, {pipeline_mode = #tpu.pipeline_mode<synchronous>, transform_indices = @transform_6, window_bounds = array<i64: 1, 512>}, {pipeline_mode = #tpu.pipeline_mode<synchronous>, transform_indices = @transform_7, window_bounds = array<i64: 512, 128>}, {pipeline_mode = #tpu.pipeline_mode<synchronous>, transform_indices = @transform_8, window_bounds = array<i64: 1, 128>}, {transform_indices = @transform_9, window_bounds = array<i64: 8, 128>}]} {
    %c0 = arith.constant 0 : index
    %c0_0 = arith.constant 0 : index
    %0 = vector.load %arg1[%c0, %c0_0] : memref<8x128xf32, #tpu.memory_space<vmem>>, vector<8x128xf32>
    %1 = arith.truncf %0 : vector<8x128xf32> to vector<8x128xbf16>
    %c0_1 = arith.constant 0 : index
    %c0_2 = arith.constant 0 : index
    %2 = vector.load %arg2[%c0_1, %c0_2] : memref<128x512xbf16, #tpu.memory_space<vmem>>, vector<128x512xbf16>
    %cst = arith.constant dense<0.000000e+00> : vector<8x512xf32>
    %3 = tpu.matmul %1, %2, %cst {dimension_numbers = #tpu.dot_dimension_numbers<[1], [0], [0], [1], [0, 0, 1, 1], [], []>} : vector<8x128xbf16>, vector<128x512xbf16>, vector<8x512xf32> -> vector<8x512xf32>
    %c0_3 = arith.constant 0 : index
    %c0_4 = arith.constant 0 : index
    %4 = vector.load %arg3[%c0_3, %c0_4] : memref<1x512xf32, #tpu.memory_space<vmem>>, vector<1x512xf32>
    %5 = vector.broadcast %4 : vector<1x512xf32> to vector<8x512xf32>
    %6 = arith.addf %3, %5 : vector<8x512xf32>
    %cst_5 = arith.constant 0.000000e+00 : f32
    %7 = vector.broadcast %cst_5 : f32 to vector<8x512xf32>
    %8 = arith.maximumf %6, %7 : vector<8x512xf32>
    %9 = arith.truncf %8 : vector<8x512xf32> to vector<8x512xbf16>
    %c0_6 = arith.constant 0 : index
    %c0_7 = arith.constant 0 : index
    %10 = vector.load %arg4[%c0_6, %c0_7] : memref<512x512xbf16, #tpu.memory_space<vmem>>, vector<512x512xbf16>
    %cst_8 = arith.constant dense<0.000000e+00> : vector<8x512xf32>
    %11 = tpu.matmul %9, %10, %cst_8 {dimension_numbers = #tpu.dot_dimension_numbers<[1], [0], [0], [1], [0, 0, 1, 1], [], []>} : vector<8x512xbf16>, vector<512x512xbf16>, vector<8x512xf32> -> vector<8x512xf32>
    %c0_9 = arith.constant 0 : index
    %c0_10 = arith.constant 0 : index
    %12 = vector.load %arg5[%c0_9, %c0_10] : memref<1x512xf32, #tpu.memory_space<vmem>>, vector<1x512xf32>
    %13 = vector.broadcast %12 : vector<1x512xf32> to vector<8x512xf32>
    %14 = arith.addf %11, %13 : vector<8x512xf32>
    %cst_11 = arith.constant 0.000000e+00 : f32
    %15 = vector.broadcast %cst_11 : f32 to vector<8x512xf32>
    %16 = arith.maximumf %14, %15 : vector<8x512xf32>
    %17 = arith.truncf %16 : vector<8x512xf32> to vector<8x512xbf16>
    %c0_12 = arith.constant 0 : index
    %c0_13 = arith.constant 0 : index
    %18 = vector.load %arg6[%c0_12, %c0_13] : memref<512x512xbf16, #tpu.memory_space<vmem>>, vector<512x512xbf16>
    %cst_14 = arith.constant dense<0.000000e+00> : vector<8x512xf32>
    %19 = tpu.matmul %17, %18, %cst_14 {dimension_numbers = #tpu.dot_dimension_numbers<[1], [0], [0], [1], [0, 0, 1, 1], [], []>} : vector<8x512xbf16>, vector<512x512xbf16>, vector<8x512xf32> -> vector<8x512xf32>
    %c0_15 = arith.constant 0 : index
    %c0_16 = arith.constant 0 : index
    %20 = vector.load %arg7[%c0_15, %c0_16] : memref<1x512xf32, #tpu.memory_space<vmem>>, vector<1x512xf32>
    %21 = vector.broadcast %20 : vector<1x512xf32> to vector<8x512xf32>
    %22 = arith.addf %19, %21 : vector<8x512xf32>
    %cst_17 = arith.constant 0.000000e+00 : f32
    %23 = vector.broadcast %cst_17 : f32 to vector<8x512xf32>
    %24 = arith.maximumf %22, %23 : vector<8x512xf32>
    %25 = arith.truncf %24 : vector<8x512xf32> to vector<8x512xbf16>
    %c0_18 = arith.constant 0 : index
    %c0_19 = arith.constant 0 : index
    %26 = vector.load %arg8[%c0_18, %c0_19] : memref<512x128xbf16, #tpu.memory_space<vmem>>, vector<512x128xbf16>
    %cst_20 = arith.constant dense<0.000000e+00> : vector<8x128xf32>
    %27 = tpu.matmul %25, %26, %cst_20 {dimension_numbers = #tpu.dot_dimension_numbers<[1], [0], [0], [1], [0, 0, 1, 1], [], []>} : vector<8x512xbf16>, vector<512x128xbf16>, vector<8x128xf32> -> vector<8x128xf32>
    %c0_21 = arith.constant 0 : index
    %c0_22 = arith.constant 0 : index
    %28 = vector.load %arg9[%c0_21, %c0_22] : memref<1x128xf32, #tpu.memory_space<vmem>>, vector<1x128xf32>
    %29 = vector.broadcast %28 : vector<1x128xf32> to vector<8x128xf32>
    %30 = arith.addf %27, %29 : vector<8x128xf32>
    %c0_23 = arith.constant 0 : index
    %c0_24 = arith.constant 0 : index
    %31 = vector.load %arg1[%c0_23, %c0_24] : memref<8x128xf32, #tpu.memory_space<vmem>>, vector<8x128xf32>
    %32 = arith.addf %30, %31 : vector<8x128xf32>
    %c0_25 = arith.constant 0 : index
    %c0_26 = arith.constant 0 : index
    %33 = vector.load %arg10[%c0_25, %c0_26] : memref<8x128xf32, #tpu.memory_space<vmem>>, vector<8x128xf32>
    tpu.vector_store %arg10[%c0_25, %c0_26], %32 {strides = array<i32>} : memref<8x128xf32, #tpu.memory_space<vmem>>, vector<8x128xf32>,
    return
  }
  func.func @transform_0(%arg0: i32) -> (i32, i32) {
    %c0_i32 = arith.constant 0 : i32
    %c0_i32_0 = arith.constant 0 : i32
    return %arg0, %c0_i32 : i32, i32
  }
  func.func @transform_1(%arg0: i32) -> (i32, i32) {
    %c0_i32 = arith.constant 0 : i32
    %c0_i32_0 = arith.constant 0 : i32
    %c0_i32_1 = arith.constant 0 : i32
    return %c0_i32, %c0_i32_0 : i32, i32
  }
  func.func @transform_2(%arg0: i32) -> (i32, i32) {
    %c0_i32 = arith.constant 0 : i32
    %c0_i32_0 = arith.constant 0 : i32
    %c0_i32_1 = arith.constant 0 : i32
    return %c0_i32, %c0_i32_0 : i32, i32
  }
  func.func @transform_3(%arg0: i32) -> (i32, i32) {
    %c0_i32 = arith.constant 0 : i32
    %c0_i32_0 = arith.constant 0 : i32
    %c0_i32_1 = arith.constant 0 : i32
    return %c0_i32, %c0_i32_0 : i32, i32
  }
  func.func @transform_4(%arg0: i32) -> (i32, i32) {
    %c0_i32 = arith.constant 0 : i32
    %c0_i32_0 = arith.constant 0 : i32
    %c0_i32_1 = arith.constant 0 : i32
    return %c0_i32, %c0_i32_0 : i32, i32
  }
  func.func @transform_5(%arg0: i32) -> (i32, i32) {
    %c0_i32 = arith.constant 0 : i32
    %c0_i32_0 = arith.constant 0 : i32
    %c0_i32_1 = arith.constant 0 : i32
    return %c0_i32, %c0_i32_0 : i32, i32
  }
  func.func @transform_6(%arg0: i32) -> (i32, i32) {
    %c0_i32 = arith.constant 0 : i32
    %c0_i32_0 = arith.constant 0 : i32
    %c0_i32_1 = arith.constant 0 : i32
    return %c0_i32, %c0_i32_0 : i32, i32
  }
  func.func @transform_7(%arg0: i32) -> (i32, i32) {
    %c0_i32 = arith.constant 0 : i32
    %c0_i32_0 = arith.constant 0 : i32
    %c0_i32_1 = arith.constant 0 : i32
    return %c0_i32, %c0_i32_0 : i32, i32
  }
  func.func @transform_8(%arg0: i32) -> (i32, i32) {
    %c0_i32 = arith.constant 0 : i32
    %c0_i32_0 = arith.constant 0 : i32
    %c0_i32_1 = arith.constant 0 : i32
    return %c0_i32, %c0_i32_0 : i32, i32
  }
  func.func @transform_9(%arg0: i32) -> (i32, i32) {
    %c0_i32 = arith.constant 0 : i32
    %c0_i32_0 = arith.constant 0 : i32
    return %arg0, %c0_i32 : i32, i32
  }
}

</mosaic_0001>

<llo_original>
// kernel: tpu_custom_call.1
$region0: #{tpu_custom_call.1}
  #allocation0 [shape = 'u32[]', space=smem, size = 0x4, offset = 0x4, fixed_abs, tag = 'smem constant byte address 0x4 - core index']
  #allocation1 [shape = 'u32[144,128]{1,0:T(1,128)}', space=vmem, size = 0x12000, scoped, tag = 'internal scratch']
  %s0 = inlined_call_operand.hbm [shape: f32[8,128], index: 0, kind: input, shape index: {}]
  %s1 = inlined_call_operand.hbm [shape: bf16[128,512], index: 1, kind: input, shape index: {}]
  %s2 = inlined_call_operand.hbm [shape: f32[1,512], index: 2, kind: input, shape index: {}]
  %s3 = inlined_call_operand.hbm [shape: bf16[512,512], index: 3, kind: input, shape index: {}]
  %s4 = inlined_call_operand.vmem [shape: f32[1,512], index: 4, kind: input, shape index: {}]
  %s5 = inlined_call_operand.hbm [shape: bf16[512,512], index: 5, kind: input, shape index: {}]
  %s6 = inlined_call_operand.vmem [shape: f32[1,512], index: 6, kind: input, shape index: {}]
  %s7 = inlined_call_operand.hbm [shape: bf16[512,128], index: 7, kind: input, shape index: {}]
  %s8 = inlined_call_operand.vmem [shape: f32[1,128], index: 8, kind: input, shape index: {}]
  %s9 = inlined_call_operand.hbm [shape: f32[8,128], index: 9, kind: output, shape index: {}]
  %s10 = sld [smem:[#allocation0]]
  $region70: #{tpu_custom_call.1} parent=0
    _
  %s12 = ssub.s32 1, %s10
  %s13 = scalar_select 0, %s12, %s10
  $region1: #{tpu_custom_call.1} parent=0
    #allocation2 [shape = 'u8[4096]{0}', space=vmem, size = 0x1000, scoped, tag = 'input window, operand 0, single buffered']
    #allocation3 [shape = 's32[1]{0}', space=sflag, size = 0x4, scoped, tag = 'scoped memory for tpu_custom_call.1']
    #allocation4 [shape = 's32[1]{0}', space=sflag, size = 0x4, scoped, tag = 'scoped memory for tpu_custom_call.1']
    #allocation5 [shape = 'u8[131072]{0}', space=vmem, size = 0x20000, scoped, tag = 'input window, operand 1, single buffered']
    #allocation6 [shape = 's32[1]{0}', space=sflag, size = 0x4, scoped, tag = 'scoped memory for tpu_custom_call.1']
    #allocation7 [shape = 'u8[2048]{0}', space=vmem, size = 0x800, scoped, tag = 'input window, operand 2, single buffered']
    #allocation8 [shape = 'u8[524288]{0}', space=vmem, size = 0x80000, scoped, tag = 'input window, operand 3, single buffered']
    #allocation9 [shape = 's32[1]{0}', space=sflag, size = 0x4, scoped, tag = 'scoped memory for tpu_custom_call.1']
    #allocation10 [shape = 'u8[524288]{0}', space=vmem, size = 0x80000, scoped, tag = 'input window, operand 5, single buffered']
    #allocation11 [shape = 'u8[131072]{0}', space=vmem, size = 0x20000, scoped, tag = 'input window, operand 7, single buffered']
    #allocation12 [shape = 's32[1]{0}', space=sflag, size = 0x4, scoped, tag = 'scoped memory for tpu_custom_call.1']
    #allocation13 [shape = 'u8[4096]{0}', space=vmem, size = 0x1000, scoped, tag = 'output window, operand 0, single buffered']
    %14 = vsyncpa [#allocation3], 0
    %15 = vsyncpa [#allocation6], 0
    %16 = vsyncpa [#allocation9], 0
    %17 = vsyncpa [#allocation12], 0
    %18 = vsyncpa [#allocation4], 0
    // Predicated region
    $region2: #{tpu_custom_call.1} parent=1 // pred_check
      _
    $region3: #{tpu_custom_call.1} parent=1 // pred_check_branch
      %20 = sbr.rel (0) target = $region5
    $region4: #{tpu_custom_call.1} parent=1 // pred_region
      %s22 = ssub.s32 128, 128
      %23 = vsyncadd [#allocation3], %s22
      %s25 = sshll.u32 [#allocation2], 4
      %s26 = int_to_ptr.vmem [resolvable:$true] %s25
      %28 = dma.hbm_to_vmem [thread:$0]  %s0, 128, %s26, [#allocation3]
    $region5: #{tpu_custom_call.1} parent=1 // pred_fallthru
      _
    // Predicated region
    $region6: #{tpu_custom_call.1} parent=1 // pred_check
      _
    $region7: #{tpu_custom_call.1} parent=1 // pred_check_branch
      %30 = sbr.rel (0) target = $region9
    $region8: #{tpu_custom_call.1} parent=1 // pred_region
      %s32 = ssub.s32 4096, 4096
      %33 = vsyncadd [#allocation6], %s32
      %s34 = sshll.u32 [#allocation5], 4
      %s35 = int_to_ptr.vmem [resolvable:$true] %s34
      %40 = dma.hbm_to_vmem [thread:$0]  %s1, 4096, %s35, [#allocation6], 256, 256, 16
    $region9: #{tpu_custom_call.1} parent=1 // pred_fallthru
      _
    // Predicated region
    $region10: #{tpu_custom_call.1} parent=1 // pred_check
      _
    $region11: #{tpu_custom_call.1} parent=1 // pred_check_branch
      %42 = sbr.rel (0) target = $region13
    $region12: #{tpu_custom_call.1} parent=1 // pred_region
      %s44 = ssub.s32 64, 64
      %45 = vsyncadd [#allocation6], %s44
      %s47 = sshll.u32 [#allocation7], 4
      %s48 = int_to_ptr.vmem [resolvable:$true] %s47
      %50 = dma.hbm_to_vmem [thread:$0]  %s2, 64, %s48, [#allocation6]
    $region13: #{tpu_custom_call.1} parent=1 // pred_fallthru
      _
    // Predicated region
    $region14: #{tpu_custom_call.1} parent=1 // pred_check
      _
    $region15: #{tpu_custom_call.1} parent=1 // pred_check_branch
      %52 = sbr.rel (0) target = $region17
    $region16: #{tpu_custom_call.1} parent=1 // pred_region
      %s54 = ssub.s32 16384, 16384
      %55 = vsyncadd [#allocation9], %s54
      %s56 = sshll.u32 [#allocation8], 4
      %s57 = int_to_ptr.vmem [resolvable:$true] %s56
      %62 = dma.hbm_to_vmem [thread:$0]  %s3, 16384, %s57, [#allocation9], 256, 256, 16
    $region17: #{tpu_custom_call.1} parent=1 // pred_fallthru
      _
    // Predicated region
    $region18: #{tpu_custom_call.1} parent=1 // pred_check
      _
    $region19: #{tpu_custom_call.1} parent=1 // pred_check_branch
      %64 = sbr.rel (0) target = $region21
    $region20: #{tpu_custom_call.1} parent=1 // pred_region
      _
    $region21: #{tpu_custom_call.1} parent=1 // pred_fallthru
      _
    // Predicated region
    $region22: #{tpu_custom_call.1} parent=1 // pred_check
      _
    $region23: #{tpu_custom_call.1} parent=1 // pred_check_branch
      %66 = sbr.rel (0) target = $region25
    $region24: #{tpu_custom_call.1} parent=1 // pred_region
      %s68 = ssub.s32 16384, 16384
      %69 = vsyncadd [#allocation9], %s68
      %s70 = sshll.u32 [#allocation10], 4
      %s71 = int_to_ptr.vmem [resolvable:$true] %s70
      %76 = dma.hbm_to_vmem [thread:$0]  %s5, 16384, %s71, [#allocation9], 256, 256, 16
    $region25: #{tpu_custom_call.1} parent=1 // pred_fallthru
      _
    // Predicated region
    $region26: #{tpu_custom_call.1} parent=1 // pred_check
      _
    $region27: #{tpu_custom_call.1} parent=1 // pred_check_branch
      %78 = sbr.rel (0) target = $region29
    $region28: #{tpu_custom_call.1} parent=1 // pred_region
      _
    $region29: #{tpu_custom_call.1} parent=1 // pred_fallthru
      _
    // Predicated region
    $region30: #{tpu_custom_call.1} parent=1 // pred_check
      _
    $region31: #{tpu_custom_call.1} parent=1 // pred_check_branch
      %80 = sbr.rel (0) target = $region33
    $region32: #{tpu_custom_call.1} parent=1 // pred_region
      %s82 = ssub.s32 4096, 4096
      %83 = vsyncadd [#allocation12], %s82
      %s84 = sshll.u32 [#allocation11], 4
      %s85 = int_to_ptr.vmem [resolvable:$true] %s84
      %90 = dma.hbm_to_vmem [thread:$0]  %s7, 4096, %s85, [#allocation12], 64, 64, 4
    $region33: #{tpu_custom_call.1} parent=1 // pred_fallthru
      _
    // Predicated region
    $region34: #{tpu_custom_call.1} parent=1 // pred_check
      _
    $region35: #{tpu_custom_call.1} parent=1 // pred_check_branch
      %92 = sbr.rel (0) target = $region37
    $region36: #{tpu_custom_call.1} parent=1 // pred_region
      _
    $region37: #{tpu_custom_call.1} parent=1 // pred_fallthru
      _
    // Predicated region
    $region38: #{tpu_custom_call.1} parent=1 // pred_check
      _
    $region39: #{tpu_custom_call.1} parent=1 // pred_check_branch
      %94 = sbr.rel (0) target = $region41
    $region40: #{tpu_custom_call.1} parent=1 // pred_region
      %95 = dma.done [#allocation3], 128
    $region41: #{tpu_custom_call.1} parent=1 // pred_fallthru
      _
    // Predicated region
    $region42: #{tpu_custom_call.1} parent=1 // pred_check
      _
    $region43: #{tpu_custom_call.1} parent=1 // pred_check_branch
      %97 = sbr.rel (0) target = $region45
    $region44: #{tpu_custom_call.1} parent=1 // pred_region
      %98 = dma.done [#allocation6], 4096
    $region45: #{tpu_custom_call.1} parent=1 // pred_fallthru
      _
    // Predicated region
    $region46: #{tpu_custom_call.1} parent=1 // pred_check
      _
    $region47: #{tpu_custom_call.1} parent=1 // pred_check_branch
      %100 = sbr.rel (0) target = $region49
    $region48: #{tpu_custom_call.1} parent=1 // pred_region
      %101 = dma.done [#allocation6], 64
    $region49: #{tpu_custom_call.1} parent=1 // pred_fallthru
      _
    // Predicated region
    $region50: #{tpu_custom_call.1} parent=1 // pred_check
      _
    $region51: #{tpu_custom_call.1} parent=1 // pred_check_branch
      %103 = sbr.rel (0) target = $region53
    $region52: #{tpu_custom_call.1} parent=1 // pred_region
      %104 = dma.done [#allocation9], 16384
    $region53: #{tpu_custom_call.1} parent=1 // pred_fallthru
      _
    // Predicated region
    $region54: #{tpu_custom_call.1} parent=1 // pred_check
      _
    $region55: #{tpu_custom_call.1} parent=1 // pred_check_branch
      %106 = sbr.rel (0) target = $region57
    $region56: #{tpu_custom_call.1} parent=1 // pred_region
      %107 = dma.done [#allocation9], 16384
    $region57: #{tpu_custom_call.1} parent=1 // pred_fallthru
      _
    // Predicated region
    $region58: #{tpu_custom_call.1} parent=1 // pred_check
      _
    $region59: #{tpu_custom_call.1} parent=1 // pred_check_branch
      %109 = sbr.rel (0) target = $region61
    $region60: #{tpu_custom_call.1} parent=1 // pred_region
      %110 = dma.done [#allocation12], 4096
    $region61: #{tpu_custom_call.1} parent=1 // pred_fallthru
      _
    %v112 = vld [vmem:[#allocation2] sm:$0xff]
    %v113 = vpack.c.bf16 %v112, %v112
    %v114 = vld [vmem:[#allocation5] sm:$0xff]
    %v115 = vld [vmem:[#allocation5 + $0x8] sm:$0xff]
    %v116 = vld [vmem:[#allocation5 + $0x10] sm:$0xff]
    %v117 = vld [vmem:[#allocation5 + $0x18] sm:$0xff]
    %v118 = vld [vmem:[#allocation5 + $0x20] sm:$0xff]
    %v119 = vld [vmem:[#allocation5 + $0x28] sm:$0xff]
    %v120 = vld [vmem:[#allocation5 + $0x30] sm:$0xff]
    %v121 = vld [vmem:[#allocation5 + $0x38] sm:$0xff]
    %v122 = vld [vmem:[#allocation5 + $0x40] sm:$0xff]
    %v123 = vld [vmem:[#allocation5 + $0x48] sm:$0xff]
    %v124 = vld [vmem:[#allocation5 + $0x50] sm:$0xff]
    %v125 = vld [vmem:[#allocation5 + $0x58] sm:$0xff]
    %v126 = vld [vmem:[#allocation5 + $0x60] sm:$0xff]
    %v127 = vld [vmem:[#allocation5 + $0x68] sm:$0xff]
    %v128 = vld [vmem:[#allocation5 + $0x70] sm:$0xff]
    %v129 = vld [vmem:[#allocation5 + $0x78] sm:$0xff]
    %v130 = vld [vmem:[#allocation5 + $0x80] sm:$0xff]
    %v131 = vld [vmem:[#allocation5 + $0x88] sm:$0xff]
    %v132 = vld [vmem:[#allocation5 + $0x90] sm:$0xff]
    %v133 = vld [vmem:[#allocation5 + $0x98] sm:$0xff]
    %v134 = vld [vmem:[#allocation5 + $0xa0] sm:$0xff]
    %v135 = vld [vmem:[#allocation5 + $0xa8] sm:$0xff]
    %v136 = vld [vmem:[#allocation5 + $0xb0] sm:$0xff]
    %v137 = vld [vmem:[#allocation5 + $0xb8] sm:$0xff]
    %v138 = vld [vmem:[#allocation5 + $0xc0] sm:$0xff]
    %v139 = vld [vmem:[#allocation5 + $0xc8] sm:$0xff]
    %v140 = vld [vmem:[#allocation5 + $0xd0] sm:$0xff]
    %v141 = vld [vmem:[#allocation5 + $0xd8] sm:$0xff]
    %v142 = vld [vmem:[#allocation5 + $0xe0] sm:$0xff]
    %v143 = vld [vmem:[#allocation5 + $0xe8] sm:$0xff]
    %v144 = vld [vmem:[#allocation5 + $0xf0] sm:$0xff]
    %v145 = vld [vmem:[#allocation5 + $0xf8] sm:$0xff]
    %v146 = vld [vmem:[#allocation7] sm:$0xf]
    %v148 = vlaneseq
    %v149 = vshrl.u32 %v148, 7
    %v150 = vsub.s32 0, %v149
    %v151 = vrot.slane %v146, %v150
    %v152 = vlaneseq
    %v153 = vshrl.u32 %v152, 7
    %v154 = vsub.s32 1, %v153
    %v155 = vrot.slane %v146, %v154
    %v156 = vlaneseq
    %v157 = vshrl.u32 %v156, 7
    %v158 = vsub.s32 2, %v157
    %v159 = vrot.slane %v146, %v158
    %v160 = vlaneseq
    %v161 = vshrl.u32 %v160, 7
    %v162 = vsub.s32 3, %v161
    %v163 = vrot.slane %v146, %v162
    %v200 = vunpack.c.l.b16 %v114
    %v201 = vunpack.c.h.b16 %v114
    %v202 = vunpack.c.l.b16 %v115
    %v203 = vunpack.c.h.b16 %v115
    %v204 = vunpack.c.l.b16 %v116
    %v205 = vunpack.c.h.b16 %v116
    %v206 = vunpack.c.l.b16 %v117
    %v207 = vunpack.c.h.b16 %v117
    %v208 = vunpack.c.l.b16 %v118
    %v209 = vunpack.c.h.b16 %v118
    %v210 = vunpack.c.l.b16 %v119
    %v211 = vunpack.c.h.b16 %v119
    %v212 = vunpack.c.l.b16 %v120
    %v213 = vunpack.c.h.b16 %v120
    %v214 = vunpack.c.l.b16 %v121
    %v215 = vunpack.c.h.b16 %v121
    %v216 = vunpack.c.l.b16 %v122
    %v217 = vunpack.c.h.b16 %v122
    %v218 = vunpack.c.l.b16 %v123
    %v219 = vunpack.c.h.b16 %v123
    %v220 = vunpack.c.l.b16 %v124
    %v221 = vunpack.c.h.b16 %v124
    %v222 = vunpack.c.l.b16 %v125
    %v223 = vunpack.c.h.b16 %v125
    %v224 = vunpack.c.l.b16 %v126
    %v225 = vunpack.c.h.b16 %v126
    %v226 = vunpack.c.l.b16 %v127
    %v227 = vunpack.c.h.b16 %v127
    %v228 = vunpack.c.l.b16 %v128
    %v229 = vunpack.c.h.b16 %v128
    %v230 = vunpack.c.l.b16 %v129
    %v231 = vunpack.c.h.b16 %v129
    %v232 = vunpack.c.l.b16 %v130
    %v233 = vunpack.c.h.b16 %v130
    %v234 = vunpack.c.l.b16 %v131
    %v235 = vunpack.c.h.b16 %v131
    %v236 = vunpack.c.l.b16 %v132
    %v237 = vunpack.c.h.b16 %v132
    %v238 = vunpack.c.l.b16 %v133
    %v239 = vunpack.c.h.b16 %v133
    %v240 = vunpack.c.l.b16 %v134
    %v241 = vunpack.c.h.b16 %v134
    %v242 = vunpack.c.l.b16 %v135
    %v243 = vunpack.c.h.b16 %v135
    %v244 = vunpack.c.l.b16 %v136
    %v245 = vunpack.c.h.b16 %v136
    %v246 = vunpack.c.l.b16 %v137
    %v247 = vunpack.c.h.b16 %v137
    %v248 = vunpack.c.l.b16 %v138
    %v249 = vunpack.c.h.b16 %v138
    %v250 = vunpack.c.l.b16 %v139
    %v251 = vunpack.c.h.b16 %v139
    %v252 = vunpack.c.l.b16 %v140
    %v253 = vunpack.c.h.b16 %v140
    %v254 = vunpack.c.l.b16 %v141
    %v255 = vunpack.c.h.b16 %v141
    %v256 = vunpack.c.l.b16 %v142
    %v257 = vunpack.c.h.b16 %v142
    %v258 = vunpack.c.l.b16 %v143
    %v259 = vunpack.c.h.b16 %v143
    %v260 = vunpack.c.l.b16 %v144
    %v261 = vunpack.c.h.b16 %v144
    %v262 = vunpack.c.l.b16 %v145
    %v263 = vunpack.c.h.b16 %v145
    %v264 = vpack.c.b16 %v204, %v200
    %v265 = vpack.c.b16 %v205, %v201
    %v266 = vpack.c.b16 %v206, %v202
    %v267 = vpack.c.b16 %v207, %v203
    %v268 = vpack.c.b16 %v212, %v208
    %v269 = vpack.c.b16 %v213, %v209
    %v270 = vpack.c.b16 %v214, %v210
    %v271 = vpack.c.b16 %v215, %v211
    %v272 = vpack.c.b16 %v220, %v216
    %v273 = vpack.c.b16 %v221, %v217
    %v274 = vpack.c.b16 %v222, %v218
    %v275 = vpack.c.b16 %v223, %v219
    %v276 = vpack.c.b16 %v228, %v224
    %v277 = vpack.c.b16 %v229, %v225
    %v278 = vpack.c.b16 %v230, %v226
    %v279 = vpack.c.b16 %v231, %v227
    %v280 = vpack.c.b16 %v236, %v232
    %v281 = vpack.c.b16 %v237, %v233
    %v282 = vpack.c.b16 %v238, %v234
    %v283 = vpack.c.b16 %v239, %v235
    %v284 = vpack.c.b16 %v244, %v240
    %v285 = vpack.c.b16 %v245, %v241
    %v286 = vpack.c.b16 %v246, %v242
    %v287 = vpack.c.b16 %v247, %v243
    %v288 = vpack.c.b16 %v252, %v248
    %v289 = vpack.c.b16 %v253, %v249
    %v290 = vpack.c.b16 %v254, %v250
    %v291 = vpack.c.b16 %v255, %v251
    %v292 = vpack.c.b16 %v260, %v256
    %v293 = vpack.c.b16 %v261, %v257
    %v294 = vpack.c.b16 %v262, %v258
    %v295 = vpack.c.b16 %v263, %v259
    %328 = vmatprep.subr.bf16.mxu0 %v293
    %329 = vmatpush1.bf16.msra.mxu0 %v292
    %330 = vmatprep.subr.bf16.mxu0 %v289
    %331 = vmatpush1.bf16.msra.mxu0 %v288
    %332 = vmatprep.subr.bf16.mxu0 %v285
    %333 = vmatpush1.bf16.msra.mxu0 %v284
    %334 = vmatprep.subr.bf16.mxu0 %v281
    %335 = vmatpush1.bf16.msra.mxu0 %v280
    %336 = vmatprep.subr.bf16.mxu0 %v277
    %337 = vmatpush1.bf16.msra.mxu0 %v276
    %338 = vmatprep.subr.bf16.mxu0 %v273
    %339 = vmatpush1.bf16.msra.mxu0 %v272
    %340 = vmatprep.subr.bf16.mxu0 %v269
    %341 = vmatpush1.bf16.msra.mxu0 %v268
    %342 = vmatprep.subr.bf16.mxu0 %v265
    %343 = vmatpush1.bf16.msra.mxu0 %v264
    %344 = vmatprep.subr.bf16.mxu0 0
    %345 = vmatpush2.bf16.msra.mxu0 0
    %346 = vmatprep.subr.bf16.mxu0 0
    %347 = vmatpush2.bf16.msra.mxu0 0
    %348 = vmatprep.subr.bf16.mxu0 0
    %349 = vmatpush2.bf16.msra.mxu0 0
    %350 = vmatprep.subr.bf16.mxu0 0
    %351 = vmatpush2.bf16.msra.mxu0 0
    %352 = vmatprep.subr.bf16.mxu0 0
    %353 = vmatpush2.bf16.msra.mxu0 0
    %354 = vmatprep.subr.bf16.mxu0 0
    %355 = vmatpush2.bf16.msra.mxu0 0
    %356 = vmatprep.subr.bf16.mxu0 0
    %357 = vmatpush2.bf16.msra.mxu0 0
    %358 = vmatprep.subr.bf16.mxu0 0
    %359 = vmatpush2.bf16.msra.mxu0 0
    %360 = vmatprep.mubr.bf16.mxu0 0
    %361 = vmatmul.mubr.bf16.gmra.mxu0 %v113
    %v362 = vpop.f32.mrf.mxu0
    %v363 = vadd.f32 %v151, %v362
    %v364 = vpop.f32.mrf.mxu0
    %v365 = vadd.f32 %v155, %v364
    %v366 = vpop.f32.mrf.mxu0
    %v367 = vpop.f32.mrf.mxu0
    %368 = vdwg.mxu0
    %369 = vmatprep.subr.bf16.mxu0 %v295
    %370 = vmatpush1.bf16.msra.mxu0 %v294
    %371 = vmatprep.subr.bf16.mxu0 %v291
    %372 = vmatpush1.bf16.msra.mxu0 %v290
    %373 = vmatprep.subr.bf16.mxu0 %v287
    %374 = vmatpush1.bf16.msra.mxu0 %v286
    %375 = vmatprep.subr.bf16.mxu0 %v283
    %376 = vmatpush1.bf16.msra.mxu0 %v282
    %377 = vmatprep.subr.bf16.mxu0 %v279
    %378 = vmatpush1.bf16.msra.mxu0 %v278
    %379 = vmatprep.subr.bf16.mxu0 %v275
    %380 = vmatpush1.bf16.msra.mxu0 %v274
    %381 = vmatprep.subr.bf16.mxu0 %v271
    %382 = vmatpush1.bf16.msra.mxu0 %v270
    %383 = vmatprep.subr.bf16.mxu0 %v267
    %384 = vmatpush1.bf16.msra.mxu0 %v266
    %385 = vmatprep.subr.bf16.mxu0 0
    %386 = vmatpush2.bf16.msra.mxu0 0
    %387 = vmatprep.subr.bf16.mxu0 0
    %388 = vmatpush2.bf16.msra.mxu0 0
    %389 = vmatprep.subr.bf16.mxu0 0
    %390 = vmatpush2.bf16.msra.mxu0 0
    %391 = vmatprep.subr.bf16.mxu0 0
    %392 = vmatpush2.bf16.msra.mxu0 0
    %393 = vmatprep.subr.bf16.mxu0 0
    %394 = vmatpush2.bf16.msra.mxu0 0
    %395 = vmatprep.subr.bf16.mxu0 0
    %396 = vmatpush2.bf16.msra.mxu0 0
    %397 = vmatprep.subr.bf16.mxu0 0
    %398 = vmatpush2.bf16.msra.mxu0 0
    %399 = vmatprep.subr.bf16.mxu0 0
    %400 = vmatpush2.bf16.msra.mxu0 0
    %401 = vmatprep.mubr.bf16.mxu0 0
    %402 = vmatmul.mubr.bf16.gmra.mxu0 %v113
    %v403 = vpop.f32.mrf.mxu0
    %v404 = vadd.f32 %v159, %v403
    %v405 = vpop.f32.mrf.mxu0
    %v406 = vadd.f32 %v163, %v405
    %v407 = vpop.f32.mrf.mxu0
    %v408 = vpop.f32.mrf.mxu0
    %409 = vdwg.mxu0
    %v410 = vmax.f32 %v363, 0.0
    %v411 = vmax.f32 %v365, 0.0
    %v412 = vmax.f32 %v404, 0.0
    %v413 = vmax.f32 %v406, 0.0
    %v414 = vpack.c.bf16 %v410, %v410
    %v415 = vpack.c.bf16 %v411, %v411
    %v416 = vpack.c.bf16 %v412, %v412
    %v417 = vpack.c.bf16 %v413, %v413
    %v418 = vld [vmem:[#allocation8] sm:$0xff]
    %v419 = vld [vmem:[#allocation8 + $0x8] sm:$0xff]
    %v420 = vld [vmem:[#allocation8 + $0x10] sm:$0xff]
    %v421 = vld [vmem:[#allocation8 + $0x18] sm:$0xff]
    %v422 = vld [vmem:[#allocation8 + $0x20] sm:$0xff]
    %v423 = vld [vmem:[#allocation8 + $0x28] sm:$0xff]
    %v424 = vld [vmem:[#allocation8 + $0x30] sm:$0xff]
    %v425 = vld [vmem:[#allocation8 + $0x38] sm:$0xff]
    %v426 = vld [vmem:[#allocation8 + $0x40] sm:$0xff]
    %v427 = vld [vmem:[#allocation8 + $0x48] sm:$0xff]
    %v428 = vld [vmem:[#allocation8 + $0x50] sm:$0xff]
    %v429 = vld [vmem:[#allocation8 + $0x58] sm:$0xff]
    %v430 = vld [vmem:[#allocation8 + $0x60] sm:$0xff]
    %v431 = vld [vmem:[#allocation8 + $0x68] sm:$0xff]
    %v432 = vld [vmem:[#allocation8 + $0x70] sm:$0xff]
    %v433 = vld [vmem:[#allocation8 + $0x78] sm:$0xff]
    %v434 = vld [vmem:[#allocation8 + $0x80] sm:$0xff]
    %v435 = vld [vmem:[#allocation8 + $0x88] sm:$0xff]
    %v436 = vld [vmem:[#allocation8 + $0x90] sm:$0xff]
    %v437 = vld [vmem:[#allocation8 + $0x98] sm:$0xff]
    %v438 = vld [vmem:[#allocation8 + $0xa0] sm:$0xff]
    %v439 = vld [vmem:[#allocation8 + $0xa8] sm:$0xff]
    %v440 = vld [vmem:[#allocation8 + $0xb0] sm:$0xff]
    %v441 = vld [vmem:[#allocation8 + $0xb8] sm:$0xff]
    %v442 = vld [vmem:[#allocation8 + $0xc0] sm:$0xff]
    %v443 = vld [vmem:[#allocation8 + $0xc8] sm:$0xff]
    %v444 = vld [vmem:[#allocation8 + $0xd0] sm:$0xff]
    %v445 = vld [vmem:[#allocation8 + $0xd8] sm:$0xff]
    %v446 = vld [vmem:[#allocation8 + $0xe0] sm:$0xff]
    %v447 = vld [vmem:[#allocation8 + $0xe8] sm:$0xff]
    %v448 = vld [vmem:[#allocation8 + $0xf0] sm:$0xff]
    %v449 = vld [vmem:[#allocation8 + $0xf8] sm:$0xff]
    %v450 = vld [vmem:[#allocation8 + $0x100] sm:$0xff]
    %v451 = vld [vmem:[#allocation8 + $0x108] sm:$0xff]
    %v452 = vld [vmem:[#allocation8 + $0x110] sm:$0xff]
    %v453 = vld [vmem:[#allocation8 + $0x118] sm:$0xff]
    %v454 = vld [vmem:[#allocation8 + $0x120] sm:$0xff]
    %v455 = vld [vmem:[#allocation8 + $0x128] sm:$0xff]
    %v456 = vld [vmem:[#allocation8 + $0x130] sm:$0xff]
    %v457 = vld [vmem:[#allocation8 + $0x138] sm:$0xff]
    %v458 = vld [vmem:[#allocation8 + $0x140] sm:$0xff]
    %v459 = vld [vmem:[#allocation8 + $0x148] sm:$0xff]
    %v460 = vld [vmem:[#allocation8 + $0x150] sm:$0xff]
    %v461 = vld [vmem:[#allocation8 + $0x158] sm:$0xff]
    %v462 = vld [vmem:[#allocation8 + $0x160] sm:$0xff]
    %v463 = vld [vmem:[#allocation8 + $0x168] sm:$0xff]
    %v464 = vld [vmem:[#allocation8 + $0x170] sm:$0xff]
    %v465 = vld [vmem:[#allocation8 + $0x178] sm:$0xff]
    %v466 = vld [vmem:[#allocation8 + $0x180] sm:$0xff]
    %v467 = vld [vmem:[#allocation8 + $0x188] sm:$0xff]
    %v468 = vld [vmem:[#allocation8 + $0x190] sm:$0xff]
    %v469 = vld [vmem:[#allocation8 + $0x198] sm:$0xff]
    %v470 = vld [vmem:[#allocation8 + $0x1a0] sm:$0xff]
    %v471 = vld [vmem:[#allocation8 + $0x1a8] sm:$0xff]
    %v472 = vld [vmem:[#allocation8 + $0x1b0] sm:$0xff]
    %v473 = vld [vmem:[#allocation8 + $0x1b8] sm:$0xff]
    %v474 = vld [vmem:[#allocation8 + $0x1c0] sm:$0xff]
    %v475 = vld [vmem:[#allocation8 + $0x1c8] sm:$0xff]
    %v476 = vld [vmem:[#allocation8 + $0x1d0] sm:$0xff]
    %v477 = vld [vmem:[#allocation8 + $0x1d8] sm:$0xff]
    %v478 = vld [vmem:[#allocation8 + $0x1e0] sm:$0xff]
    %v479 = vld [vmem:[#allocation8 + $0x1e8] sm:$0xff]
    %v480 = vld [vmem:[#allocation8 + $0x1f0] sm:$0xff]
    %v481 = vld [vmem:[#allocation8 + $0x1f8] sm:$0xff]
    %v482 = vld [vmem:[#allocation8 + $0x200] sm:$0xff]
    %v483 = vld [vmem:[#allocation8 + $0x208] sm:$0xff]
    %v484 = vld [vmem:[#allocation8 + $0x210] sm:$0xff]
    %v485 = vld [vmem:[#allocation8 + $0x218] sm:$0xff]
    %v486 = vld [vmem:[#allocation8 + $0x220] sm:$0xff]
    %v487 = vld [vmem:[#allocation8 + $0x228] sm:$0xff]
    %v488 = vld [vmem:[#allocation8 + $0x230] sm:$0xff]
    %v489 = vld [vmem:[#allocation8 + $0x238] sm:$0xff]
    %v490 = vld [vmem:[#allocation8 + $0x240] sm:$0xff]
    %v491 = vld [vmem:[#allocation8 + $0x248] sm:$0xff]
    %v492 = vld [vmem:[#allocation8 + $0x250] sm:$0xff]
    %v493 = vld [vmem:[#allocation8 + $0x258] sm:$0xff]
    %v494 = vld [vmem:[#allocation8 + $0x260] sm:$0xff]
    %v495 = vld [vmem:[#allocation8 + $0x268] sm:$0xff]
    %v496 = vld [vmem:[#allocation8 + $0x270] sm:$0xff]
    %v497 = vld [vmem:[#allocation8 + $0x278] sm:$0xff]
    %v498 = vld [vmem:[#allocation8 + $0x280] sm:$0xff]
    %v499 = vld [vmem:[#allocation8 + $0x288] sm:$0xff]
    %v500 = vld [vmem:[#allocation8 + $0x290] sm:$0xff]
    %v501 = vld [vmem:[#allocation8 + $0x298] sm:$0xff]
    %v502 = vld [vmem:[#allocation8 + $0x2a0] sm:$0xff]
    %v503 = vld [vmem:[#allocation8 + $0x2a8] sm:$0xff]
    %v504 = vld [vmem:[#allocation8 + $0x2b0] sm:$0xff]
    %v505 = vld [vmem:[#allocation8 + $0x2b8] sm:$0xff]
    %v506 = vld [vmem:[#allocation8 + $0x2c0] sm:$0xff]
    %v507 = vld [vmem:[#allocation8 + $0x2c8] sm:$0xff]
    %v508 = vld [vmem:[#allocation8 + $0x2d0] sm:$0xff]
    %v509 = vld [vmem:[#allocation8 + $0x2d8] sm:$0xff]
    %v510 = vld [vmem:[#allocation8 + $0x2e0] sm:$0xff]
    %v511 = vld [vmem:[#allocation8 + $0x2e8] sm:$0xff]
    %v512 = vld [vmem:[#allocation8 + $0x2f0] sm:$0xff]
    %v513 = vld [vmem:[#allocation8 + $0x2f8] sm:$0xff]
    %v514 = vld [vmem:[#allocation8 + $0x300] sm:$0xff]
    %v515 = vld [vmem:[#allocation8 + $0x308] sm:$0xff]
    %v516 = vld [vmem:[#allocation8 + $0x310] sm:$0xff]
    %v517 = vld [vmem:[#allocation8 + $0x318] sm:$0xff]
    %v518 = vld [vmem:[#allocation8 + $0x320] sm:$0xff]
    %v519 = vld [vmem:[#allocation8 + $0x328] sm:$0xff]
    %v520 = vld [vmem:[#allocation8 + $0x330] sm:$0xff]
    %v521 = vld [vmem:[#allocation8 + $0x338] sm:$0xff]
    %v522 = vld [vmem:[#allocation8 + $0x340] sm:$0xff]
    %v523 = vld [vmem:[#allocation8 + $0x348] sm:$0xff]
    %v524 = vld [vmem:[#allocation8 + $0x350] sm:$0xff]
    %v525 = vld [vmem:[#allocation8 + $0x358] sm:$0xff]
    %v526 = vld [vmem:[#allocation8 + $0x360] sm:$0xff]
    %v527 = vld [vmem:[#allocation8 + $0x368] sm:$0xff]
    %v528 = vld [vmem:[#allocation8 + $0x370] sm:$0xff]
    %v529 = vld [vmem:[#allocation8 + $0x378] sm:$0xff]
    %v530 = vld [vmem:[#allocation8 + $0x380] sm:$0xff]
    %v531 = vld [vmem:[#allocation8 + $0x388] sm:$0xff]
    %v532 = vld [vmem:[#allocation8 + $0x390] sm:$0xff]
    %v533 = vld [vmem:[#allocation8 + $0x398] sm:$0xff]
    %v534 = vld [vmem:[#allocation8 + $0x3a0] sm:$0xff]
    %v535 = vld [vmem:[#allocation8 + $0x3a8] sm:$0xff]
    %v536 = vld [vmem:[#allocation8 + $0x3b0] sm:$0xff]
    %v537 = vld [vmem:[#allocation8 + $0x3b8] sm:$0xff]
    %v538 = vld [vmem:[#allocation8 + $0x3c0] sm:$0xff]
    %v539 = vld [vmem:[#allocation8 + $0x3c8] sm:$0xff]
    %v540 = vld [vmem:[#allocation8 + $0x3d0] sm:$0xff]
    %v541 = vld [vmem:[#allocation8 + $0x3d8] sm:$0xff]
    %v542 = vld [vmem:[#allocation8 + $0x3e0] sm:$0xff]
    %v543 = vld [vmem:[#allocation8 + $0x3e8] sm:$0xff]
    %v544 = vld [vmem:[#allocation8 + $0x3f0] sm:$0xff]
    %v545 = vld [vmem:[#allocation8 + $0x3f8] sm:$0xff]
    %v546 = vld [vmem:[%s4] sm:$0xf]
    %v548 = vlaneseq
    %v549 = vshrl.u32 %v548, 7
    %v550 = vsub.s32 0, %v549
    %v551 = vrot.slane %v546, %v550
    %v552 = vlaneseq
    %v553 = vshrl.u32 %v552, 7
    %v554 = vsub.s32 1, %v553
    %v555 = vrot.slane %v546, %v554
    %v556 = vlaneseq
    %v557 = vshrl.u32 %v556, 7
    %v558 = vsub.s32 2, %v557
    %v559 = vrot.slane %v546, %v558
    %v560 = vlaneseq
    %v561 = vshrl.u32 %v560, 7
    %v562 = vsub.s32 3, %v561
    %v563 = vrot.slane %v546, %v562
    %v696 = vunpack.c.l.b16 %v418
    %v697 = vunpack.c.h.b16 %v418
    %v698 = vunpack.c.l.b16 %v419
    %v699 = vunpack.c.h.b16 %v419
    %v700 = vunpack.c.l.b16 %v420
    %v701 = vunpack.c.h.b16 %v420
    %v702 = vunpack.c.l.b16 %v421
    %v703 = vunpack.c.h.b16 %v421
    %v704 = vunpack.c.l.b16 %v422
    %v705 = vunpack.c.h.b16 %v422
    %v706 = vunpack.c.l.b16 %v423
    %v707 = vunpack.c.h.b16 %v423
    %v708 = vunpack.c.l.b16 %v424
    %v709 = vunpack.c.h.b16 %v424
    %v710 = vunpack.c.l.b16 %v425
    %v711 = vunpack.c.h.b16 %v425
    %v712 = vunpack.c.l.b16 %v426
    %v713 = vunpack.c.h.b16 %v426
    %v714 = vunpack.c.l.b16 %v427
    %v715 = vunpack.c.h.b16 %v427
    %v716 = vunpack.c.l.b16 %v428
    %v717 = vunpack.c.h.b16 %v428
    %v718 = vunpack.c.l.b16 %v429
    %v719 = vunpack.c.h.b16 %v429
    %v720 = vunpack.c.l.b16 %v430
    %v721 = vunpack.c.h.b16 %v430
    %v722 = vunpack.c.l.b16 %v431
    %v723 = vunpack.c.h.b16 %v431
    %v724 = vunpack.c.l.b16 %v432
    %v725 = vunpack.c.h.b16 %v432
    %v726 = vunpack.c.l.b16 %v433
    %v727 = vunpack.c.h.b16 %v433
    %v728 = vunpack.c.l.b16 %v434
    %v729 = vunpack.c.h.b16 %v434
    %v730 = vunpack.c.l.b16 %v435
    %v731 = vunpack.c.h.b16 %v435
    %v732 = vunpack.c.l.b16 %v436
    %v733 = vunpack.c.h.b16 %v436
    %v734 = vunpack.c.l.b16 %v437
    %v735 = vunpack.c.h.b16 %v437
    %v736 = vunpack.c.l.b16 %v438
    %v737 = vunpack.c.h.b16 %v438
    %v738 = vunpack.c.l.b16 %v439
    %v739 = vunpack.c.h.b16 %v439
    %v740 = vunpack.c.l.b16 %v440
    %v741 = vunpack.c.h.b16 %v440
    %v742 = vunpack.c.l.b16 %v441
    %v743 = vunpack.c.h.b16 %v441
    %v744 = vunpack.c.l.b16 %v442
    %v745 = vunpack.c.h.b16 %v442
    %v746 = vunpack.c.l.b16 %v443
    %v747 = vunpack.c.h.b16 %v443
    %v748 = vunpack.c.l.b16 %v444
    %v749 = vunpack.c.h.b16 %v444
    %v750 = vunpack.c.l.b16 %v445
    %v751 = vunpack.c.h.b16 %v445
    %v752 = vunpack.c.l.b16 %v446
    %v753 = vunpack.c.h.b16 %v446
    %v754 = vunpack.c.l.b16 %v447
    %v755 = vunpack.c.h.b16 %v447
    %v756 = vunpack.c.l.b16 %v448
    %v757 = vunpack.c.h.b16 %v448
    %v758 = vunpack.c.l.b16 %v449
    %v759 = vunpack.c.h.b16 %v449
    %v760 = vunpack.c.l.b16 %v450
    %v761 = vunpack.c.h.b16 %v450
    %v762 = vunpack.c.l.b16 %v451
    %v763 = vunpack.c.h.b16 %v451
    %v764 = vunpack.c.l.b16 %v452
    %v765 = vunpack.c.h.b16 %v452
    %v766 = vunpack.c.l.b16 %v453
    %v767 = vunpack.c.h.b16 %v453
    %v768 = vunpack.c.l.b16 %v454
    %v769 = vunpack.c.h.b16 %v454
    %v770 = vunpack.c.l.b16 %v455
    %v771 = vunpack.c.h.b16 %v455
    %v772 = vunpack.c.l.b16 %v456
    %v773 = vunpack.c.h.b16 %v456
    %v774 = vunpack.c.l.b16 %v457
    %v775 = vunpack.c.h.b16 %v457
    %v776 = vunpack.c.l.b16 %v458
    %v777 = vunpack.c.h.b16 %v458
    %v778 = vunpack.c.l.b16 %v459
    %v779 = vunpack.c.h.b16 %v459
    %v780 = vunpack.c.l.b16 %v460
    %v781 = vunpack.c.h.b16 %v460
    %v782 = vunpack.c.l.b16 %v461
    %v783 = vunpack.c.h.b16 %v461
    %v784 = vunpack.c.l.b16 %v462
    %v785 = vunpack.c.h.b16 %v462
    %v786 = vunpack.c.l.b16 %v463
    %v787 = vunpack.c.h.b16 %v463
    %v788 = vunpack.c.l.b16 %v464
    %v789 = vunpack.c.h.b16 %v464
    %v790 = vunpack.c.l.b16 %v465
    %v791 = vunpack.c.h.b16 %v465
    %v792 = vunpack.c.l.b16 %v466
    %v793 = vunpack.c.h.b16 %v466
    %v794 = vunpack.c.l.b16 %v467
    %v795 = vunpack.c.h.b16 %v467
    %v796 = vunpack.c.l.b16 %v468
    %v797 = vunpack.c.h.b16 %v468
    %v798 = vunpack.c.l.b16 %v469
    %v799 = vunpack.c.h.b16 %v469
    %v800 = vunpack.c.l.b16 %v470
    %v801 = vunpack.c.h.b16 %v470
    %v802 = vunpack.c.l.b16 %v471
    %v803 = vunpack.c.h.b16 %v471
    %v804 = vunpack.c.l.b16 %v472
    %v805 = vunpack.c.h.b16 %v472
    %v806 = vunpack.c.l.b16 %v473
    %v807 = vunpack.c.h.b16 %v473
    %v808 = vunpack.c.l.b16 %v474
    %v809 = vunpack.c.h.b16 %v474
    %v810 = vunpack.c.l.b16 %v475
    %v811 = vunpack.c.h.b16 %v475
    %v812 = vunpack.c.l.b16 %v476
    %v813 = vunpack.c.h.b16 %v476
    %v814 = vunpack.c.l.b16 %v477
    %v815 = vunpack.c.h.b16 %v477
    %v816 = vunpack.c.l.b16 %v478
    %v817 = vunpack.c.h.b16 %v478
    %v818 = vunpack.c.l.b16 %v479
    %v819 = vunpack.c.h.b16 %v479
    %v820 = vunpack.c.l.b16 %v480
    %v821 = vunpack.c.h.b16 %v480
    %v822 = vunpack.c.l.b16 %v481
    %v823 = vunpack.c.h.b16 %v481
    %v824 = vunpack.c.l.b16 %v482
    %v825 = vunpack.c.h.b16 %v482
    %v826 = vunpack.c.l.b16 %v483
    %v827 = vunpack.c.h.b16 %v483
    %v828 = vunpack.c.l.b16 %v484
    %v829 = vunpack.c.h.b16 %v484
    %v830 = vunpack.c.l.b16 %v485
    %v831 = vunpack.c.h.b16 %v485
    %v832 = vunpack.c.l.b16 %v486
    %v833 = vunpack.c.h.b16 %v486
    %v834 = vunpack.c.l.b16 %v487
    %v835 = vunpack.c.h.b16 %v487
    %v836 = vunpack.c.l.b16 %v488
    %v837 = vunpack.c.h.b16 %v488
    %v838 = vunpack.c.l.b16 %v489
    %v839 = vunpack.c.h.b16 %v489
    %v840 = vunpack.c.l.b16 %v490
    %v841 = vunpack.c.h.b16 %v490
    %v842 = vunpack.c.l.b16 %v491
    %v843 = vunpack.c.h.b16 %v491
    %v844 = vunpack.c.l.b16 %v492
    %v845 = vunpack.c.h.b16 %v492
    %v846 = vunpack.c.l.b16 %v493
    %v847 = vunpack.c.h.b16 %v493
    %v848 = vunpack.c.l.b16 %v494
    %v849 = vunpack.c.h.b16 %v494
    %v850 = vunpack.c.l.b16 %v495
    %v851 = vunpack.c.h.b16 %v495
    %v852 = vunpack.c.l.b16 %v496
    %v853 = vunpack.c.h.b16 %v496
    %v854 = vunpack.c.l.b16 %v497
    %v855 = vunpack.c.h.b16 %v497
    %v856 = vunpack.c.l.b16 %v498
    %v857 = vunpack.c.h.b16 %v498
    %v858 = vunpack.c.l.b16 %v499
    %v859 = vunpack.c.h.b16 %v499
    %v860 = vunpack.c.l.b16 %v500
    %v861 = vunpack.c.h.b16 %v500
    %v862 = vunpack.c.l.b16 %v501
    %v863 = vunpack.c.h.b16 %v501
    %v864 = vunpack.c.l.b16 %v502
    %v865 = vunpack.c.h.b16 %v502
    %v866 = vunpack.c.l.b16 %v503
    %v867 = vunpack.c.h.b16 %v503
    %v868 = vunpack.c.l.b16 %v504
    %v869 = vunpack.c.h.b16 %v504
    %v870 = vunpack.c.l.b16 %v505
    %v871 = vunpack.c.h.b16 %v505
    %v872 = vunpack.c.l.b16 %v506
    %v873 = vunpack.c.h.b16 %v506
    %v874 = vunpack.c.l.b16 %v507
    %v875 = vunpack.c.h.b16 %v507
    %v876 = vunpack.c.l.b16 %v508
    %v877 = vunpack.c.h.b16 %v508
    %v878 = vunpack.c.l.b16 %v509
    %v879 = vunpack.c.h.b16 %v509
    %v880 = vunpack.c.l.b16 %v510
    %v881 = vunpack.c.h.b16 %v510
    %v882 = vunpack.c.l.b16 %v511
    %v883 = vunpack.c.h.b16 %v511
    %v884 = vunpack.c.l.b16 %v512
    %v885 = vunpack.c.h.b16 %v512
    %v886 = vunpack.c.l.b16 %v513
    %v887 = vunpack.c.h.b16 %v513
    %v888 = vunpack.c.l.b16 %v514
    %v889 = vunpack.c.h.b16 %v514
    %v890 = vunpack.c.l.b16 %v515
    %v891 = vunpack.c.h.b16 %v515
    %v892 = vunpack.c.l.b16 %v516
    %v893 = vunpack.c.h.b16 %v516
    %v894 = vunpack.c.l.b16 %v517
    %v895 = vunpack.c.h.b16 %v517
    %v896 = vunpack.c.l.b16 %v518
    %v897 = vunpack.c.h.b16 %v518
    %v898 = vunpack.c.l.b16 %v519
    %v899 = vunpack.c.h.b16 %v519
    %v900 = vunpack.c.l.b16 %v520
    %v901 = vunpack.c.h.b16 %v520
    %v902 = vunpack.c.l.b16 %v521
    %v903 = vunpack.c.h.b16 %v521
    %v904 = vunpack.c.l.b16 %v522
    %v905 = vunpack.c.h.b16 %v522
    %v906 = vunpack.c.l.b16 %v523
    %v907 = vunpack.c.h.b16 %v523
    %v908 = vunpack.c.l.b16 %v524
    %v909 = vunpack.c.h.b16 %v524
    %v910 = vunpack.c.l.b16 %v525
    %v911 = vunpack.c.h.b16 %v525
    %v912 = vunpack.c.l.b16 %v526
    %v913 = vunpack.c.h.b16 %v526
    %v914 = vunpack.c.l.b16 %v527
    %v915 = vunpack.c.h.b16 %v527
    %v916 = vunpack.c.l.b16 %v528
    %v917 = vunpack.c.h.b16 %v528
    %v918 = vunpack.c.l.b16 %v529
    %v919 = vunpack.c.h.b16 %v529
    %v920 = vunpack.c.l.b16 %v530
    %v921 = vunpack.c.h.b16 %v530
    %v922 = vunpack.c.l.b16 %v531
    %v923 = vunpack.c.h.b16 %v531
    %v924 = vunpack.c.l.b16 %v532
    %v925 = vunpack.c.h.b16 %v532
    %v926 = vunpack.c.l.b16 %v533
    %v927 = vunpack.c.h.b16 %v533
    %v928 = vunpack.c.l.b16 %v534
    %v929 = vunpack.c.h.b16 %v534
    %v930 = vunpack.c.l.b16 %v535
    %v931 = vunpack.c.h.b16 %v535
    %v932 = vunpack.c.l.b16 %v536
    %v933 = vunpack.c.h.b16 %v536
    %v934 = vunpack.c.l.b16 %v537
    %v935 = vunpack.c.h.b16 %v537
    %v936 = vunpack.c.l.b16 %v538
    %v937 = vunpack.c.h.b16 %v538
    %v938 = vunpack.c.l.b16 %v539
    %v939 = vunpack.c.h.b16 %v539
    %v940 = vunpack.c.l.b16 %v540
    %v941 = vunpack.c.h.b16 %v540
    %v942 = vunpack.c.l.b16 %v541
    %v943 = vunpack.c.h.b16 %v541
    %v944 = vunpack.c.l.b16 %v542
    %v945 = vunpack.c.h.b16 %v542
    %v946 = vunpack.c.l.b16 %v543
    %v947 = vunpack.c.h.b16 %v543
    %v948 = vunpack.c.l.b16 %v544
    %v949 = vunpack.c.h.b16 %v544
    %v950 = vunpack.c.l.b16 %v545
    %v951 = vunpack.c.h.b16 %v545
    %v952 = vpack.c.b16 %v700, %v696
    %v953 = vpack.c.b16 %v701, %v697
    %v954 = vpack.c.b16 %v702, %v698
    %v955 = vpack.c.b16 %v703, %v699
    %v956 = vpack.c.b16 %v708, %v704
    %v957 = vpack.c.b16 %v709, %v705
    %v958 = vpack.c.b16 %v710, %v706
    %v959 = vpack.c.b16 %v711, %v707
    %v960 = vpack.c.b16 %v716, %v712
    %v961 = vpack.c.b16 %v717, %v713
    %v962 = vpack.c.b16 %v718, %v714
    %v963 = vpack.c.b16 %v719, %v715
    %v964 = vpack.c.b16 %v724, %v720
    %v965 = vpack.c.b16 %v725, %v721
    %v966 = vpack.c.b16 %v726, %v722
    %v967 = vpack.c.b16 %v727, %v723
    %v968 = vpack.c.b16 %v732, %v728
    %v969 = vpack.c.b16 %v733, %v729
    %v970 = vpack.c.b16 %v734, %v730
    %v971 = vpack.c.b16 %v735, %v731
    %v972 = vpack.c.b16 %v740, %v736
    %v973 = vpack.c.b16 %v741, %v737
    %v974 = vpack.c.b16 %v742, %v738
    %v975 = vpack.c.b16 %v743, %v739
    %v976 = vpack.c.b16 %v748, %v744
    %v977 = vpack.c.b16 %v749, %v745
    %v978 = vpack.c.b16 %v750, %v746
    %v979 = vpack.c.b16 %v751, %v747
    %v980 = vpack.c.b16 %v756, %v752
    %v981 = vpack.c.b16 %v757, %v753
    %v982 = vpack.c.b16 %v758, %v754
    %v983 = vpack.c.b16 %v759, %v755
    %v984 = vpack.c.b16 %v764, %v760
    %v985 = vpack.c.b16 %v765, %v761
    %v986 = vpack.c.b16 %v766, %v762
    %v987 = vpack.c.b16 %v767, %v763
    %v988 = vpack.c.b16 %v772, %v768
    %v989 = vpack.c.b16 %v773, %v769
    %v990 = vpack.c.b16 %v774, %v770
    %v991 = vpack.c.b16 %v775, %v771
    %v992 = vpack.c.b16 %v780, %v776
    %v993 = vpack.c.b16 %v781, %v777
    %v994 = vpack.c.b16 %v782, %v778
    %v995 = vpack.c.b16 %v783, %v779
    %v996 = vpack.c.b16 %v788, %v784
    %v997 = vpack.c.b16 %v789, %v785
    %v998 = vpack.c.b16 %v790, %v786
    %v999 = vpack.c.b16 %v791, %v787
    %v1000 = vpack.c.b16 %v796, %v792
    %v1001 = vpack.c.b16 %v797, %v793
    %v1002 = vpack.c.b16 %v798, %v794
    %v1003 = vpack.c.b16 %v799, %v795
    %v1004 = vpack.c.b16 %v804, %v800
    %v1005 = vpack.c.b16 %v805, %v801
    %v1006 = vpack.c.b16 %v806, %v802
    %v1007 = vpack.c.b16 %v807, %v803
    %v1008 = vpack.c.b16 %v812, %v808
    %v1009 = vpack.c.b16 %v813, %v809
    %v1010 = vpack.c.b16 %v814, %v810
    %v1011 = vpack.c.b16 %v815, %v811
    %v1012 = vpack.c.b16 %v820, %v816
    %v1013 = vpack.c.b16 %v821, %v817
    %v1014 = vpack.c.b16 %v822, %v818
    %v1015 = vpack.c.b16 %v823, %v819
    %v1016 = vpack.c.b16 %v828, %v824
    %v1017 = vpack.c.b16 %v829, %v825
    %v1018 = vpack.c.b16 %v830, %v826
    %v1019 = vpack.c.b16 %v831, %v827
    %v1020 = vpack.c.b16 %v836, %v832
    %v1021 = vpack.c.b16 %v837, %v833
    %v1022 = vpack.c.b16 %v838, %v834
    %v1023 = vpack.c.b16 %v839, %v835
    %v1024 = vpack.c.b16 %v844, %v840
    %v1025 = vpack.c.b16 %v845, %v841
    %v1026 = vpack.c.b16 %v846, %v842
    %v1027 = vpack.c.b16 %v847, %v843
    %v1028 = vpack.c.b16 %v852, %v848
    %v1029 = vpack.c.b16 %v853, %v849
    %v1030 = vpack.c.b16 %v854, %v850
    %v1031 = vpack.c.b16 %v855, %v851
    %v1032 = vpack.c.b16 %v860, %v856
    %v1033 = vpack.c.b16 %v861, %v857
    %v1034 = vpack.c.b16 %v862, %v858
    %v1035 = vpack.c.b16 %v863, %v859
    %v1036 = vpack.c.b16 %v868, %v864
    %v1037 = vpack.c.b16 %v869, %v865
    %v1038 = vpack.c.b16 %v870, %v866
    %v1039 = vpack.c.b16 %v871, %v867
    %v1040 = vpack.c.b16 %v876, %v872
    %v1041 = vpack.c.b16 %v877, %v873
    %v1042 = vpack.c.b16 %v878, %v874
    %v1043 = vpack.c.b16 %v879, %v875
    %v1044 = vpack.c.b16 %v884, %v880
    %v1045 = vpack.c.b16 %v885, %v881
    %v1046 = vpack.c.b16 %v886, %v882
    %v1047 = vpack.c.b16 %v887, %v883
    %v1048 = vpack.c.b16 %v892, %v888
    %v1049 = vpack.c.b16 %v893, %v889
    %v1050 = vpack.c.b16 %v894, %v890
    %v1051 = vpack.c.b16 %v895, %v891
    %v1052 = vpack.c.b16 %v900, %v896
    %v1053 = vpack.c.b16 %v901, %v897
    %v1054 = vpack.c.b16 %v902, %v898
    %v1055 = vpack.c.b16 %v903, %v899
    %v1056 = vpack.c.b16 %v908, %v904
    %v1057 = vpack.c.b16 %v909, %v905
    %v1058 = vpack.c.b16 %v910, %v906
    %v1059 = vpack.c.b16 %v911, %v907
    %v1060 = vpack.c.b16 %v916, %v912
    %v1061 = vpack.c.b16 %v917, %v913
    %v1062 = vpack.c.b16 %v918, %v914
    %v1063 = vpack.c.b16 %v919, %v915
    %v1064 = vpack.c.b16 %v924, %v920
    %v1065 = vpack.c.b16 %v925, %v921
    %v1066 = vpack.c.b16 %v926, %v922
    %v1067 = vpack.c.b16 %v927, %v923
    %v1068 = vpack.c.b16 %v932, %v928
    %v1069 = vpack.c.b16 %v933, %v929
    %v1070 = vpack.c.b16 %v934, %v930
    %v1071 = vpack.c.b16 %v935, %v931
    %v1072 = vpack.c.b16 %v940, %v936
    %v1073 = vpack.c.b16 %v941, %v937
    %v1074 = vpack.c.b16 %v942, %v938
    %v1075 = vpack.c.b16 %v943, %v939
    %v1076 = vpack.c.b16 %v948, %v944
    %v1077 = vpack.c.b16 %v949, %v945
    %v1078 = vpack.c.b16 %v950, %v946
    %v1079 = vpack.c.b16 %v951, %v947
    %1208 = vmatprep.subr.bf16.mxu0 %v981
    %1209 = vmatpush1.bf16.msra.mxu0 %v980
    %1210 = vmatprep.subr.bf16.mxu0 %v977
    %1211 = vmatpush1.bf16.msra.mxu0 %v976
    %1212 = vmatprep.subr.bf16.mxu0 %v973
    %1213 = vmatpush1.bf16.msra.mxu0 %v972
    %1214 = vmatprep.subr.bf16.mxu0 %v969
    %1215 = vmatpush1.bf16.msra.mxu0 %v968
    %1216 = vmatprep.subr.bf16.mxu0 %v965
    %1217 = vmatpush1.bf16.msra.mxu0 %v964
    %1218 = vmatprep.subr.bf16.mxu0 %v961
    %1219 = vmatpush1.bf16.msra.mxu0 %v960
    %1220 = vmatprep.subr.bf16.mxu0 %v957
    %1221 = vmatpush1.bf16.msra.mxu0 %v956
    %1222 = vmatprep.subr.bf16.mxu0 %v953
    %1223 = vmatpush1.bf16.msra.mxu0 %v952
    %1224 = vmatprep.subr.bf16.mxu0 %v1013
    %1225 = vmatpush2.bf16.msra.mxu0 %v1012
    %1226 = vmatprep.subr.bf16.mxu0 %v1009
    %1227 = vmatpush2.bf16.msra.mxu0 %v1008
    %1228 = vmatprep.subr.bf16.mxu0 %v1005
    %1229 = vmatpush2.bf16.msra.mxu0 %v1004
    %1230 = vmatprep.subr.bf16.mxu0 %v1001
    %1231 = vmatpush2.bf16.msra.mxu0 %v1000
    %1232 = vmatprep.subr.bf16.mxu0 %v997
    %1233 = vmatpush2.bf16.msra.mxu0 %v996
    %1234 = vmatprep.subr.bf16.mxu0 %v993
    %1235 = vmatpush2.bf16.msra.mxu0 %v992
    %1236 = vmatprep.subr.bf16.mxu0 %v989
    %1237 = vmatpush2.bf16.msra.mxu0 %v988
    %1238 = vmatprep.subr.bf16.mxu0 %v985
    %1239 = vmatpush2.bf16.msra.mxu0 %v984
    %1240 = vmatprep.mubr.bf16.mxu0 %v415
    %1241 = vmatmul.mubr.bf16.gmra.mxu0 %v414
    %v1242 = vpop.f32.mrf.mxu0
    %v1243 = vadd.f32 %v551, %v1242
    %v1244 = vpop.f32.mrf.mxu0
    %v1245 = vadd.f32 %v555, %v1244
    %v1246 = vpop.f32.mrf.mxu0
    %v1247 = vpop.f32.mrf.mxu0
    %1248 = vdwg.mxu0
    %1249 = vmatprep.subr.bf16.mxu0 %v1045
    %1250 = vmatpush1.bf16.msra.mxu0 %v1044
    %1251 = vmatprep.subr.bf16.mxu0 %v1041
    %1252 = vmatpush1.bf16.msra.mxu0 %v1040
    %1253 = vmatprep.subr.bf16.mxu0 %v1037
    %1254 = vmatpush1.bf16.msra.mxu0 %v1036
    %1255 = vmatprep.subr.bf16.mxu0 %v1033
    %1256 = vmatpush1.bf16.msra.mxu0 %v1032
    %1257 = vmatprep.subr.bf16.mxu0 %v1029
    %1258 = vmatpush1.bf16.msra.mxu0 %v1028
    %1259 = vmatprep.subr.bf16.mxu0 %v1025
    %1260 = vmatpush1.bf16.msra.mxu0 %v1024
    %1261 = vmatprep.subr.bf16.mxu0 %v1021
    %1262 = vmatpush1.bf16.msra.mxu0 %v1020
    %1263 = vmatprep.subr.bf16.mxu0 %v1017
    %1264 = vmatpush1.bf16.msra.mxu0 %v1016
    %1265 = vmatprep.subr.bf16.mxu0 %v1077
    %1266 = vmatpush2.bf16.msra.mxu0 %v1076
    %1267 = vmatprep.subr.bf16.mxu0 %v1073
    %1268 = vmatpush2.bf16.msra.mxu0 %v1072
    %1269 = vmatprep.subr.bf16.mxu0 %v1069
    %1270 = vmatpush2.bf16.msra.mxu0 %v1068
    %1271 = vmatprep.subr.bf16.mxu0 %v1065
    %1272 = vmatpush2.bf16.msra.mxu0 %v1064
    %1273 = vmatprep.subr.bf16.mxu0 %v1061
    %1274 = vmatpush2.bf16.msra.mxu0 %v1060
    %1275 = vmatprep.subr.bf16.mxu0 %v1057
    %1276 = vmatpush2.bf16.msra.mxu0 %v1056
    %1277 = vmatprep.subr.bf16.mxu0 %v1053
    %1278 = vmatpush2.bf16.msra.mxu0 %v1052
    %1279 = vmatprep.subr.bf16.mxu0 %v1049
    %1280 = vmatpush2.bf16.msra.mxu0 %v1048
    %1281 = vmatprep.mubr.bf16.mxu0 %v417
    %1282 = vmatmul.mubr.bf16.gmra.mxu0 %v416
    %v1283 = vpop.f32.mrf.mxu0
    %v1284 = vadd.f32 %v1243, %v1283
    %v1285 = vpop.f32.mrf.mxu0
    %v1286 = vadd.f32 %v1245, %v1285
    %v1287 = vpop.f32.mrf.mxu0
    %v1288 = vpop.f32.mrf.mxu0
    %1289 = vdwg.mxu0
    %1290 = vmatprep.subr.bf16.mxu0 %v983
    %1291 = vmatpush1.bf16.msra.mxu0 %v982
    %1292 = vmatprep.subr.bf16.mxu0 %v979
    %1293 = vmatpush1.bf16.msra.mxu0 %v978
    %1294 = vmatprep.subr.bf16.mxu0 %v975
    %1295 = vmatpush1.bf16.msra.mxu0 %v974
    %1296 = vmatprep.subr.bf16.mxu0 %v971
    %1297 = vmatpush1.bf16.msra.mxu0 %v970
    %1298 = vmatprep.subr.bf16.mxu0 %v967
    %1299 = vmatpush1.bf16.msra.mxu0 %v966
    %1300 = vmatprep.subr.bf16.mxu0 %v963
    %1301 = vmatpush1.bf16.msra.mxu0 %v962
    %1302 = vmatprep.subr.bf16.mxu0 %v959
    %1303 = vmatpush1.bf16.msra.mxu0 %v958
    %1304 = vmatprep.subr.bf16.mxu0 %v955
    %1305 = vmatpush1.bf16.msra.mxu0 %v954
    %1306 = vmatprep.subr.bf16.mxu0 %v1015
    %1307 = vmatpush2.bf16.msra.mxu0 %v1014
    %1308 = vmatprep.subr.bf16.mxu0 %v1011
    %1309 = vmatpush2.bf16.msra.mxu0 %v1010
    %1310 = vmatprep.subr.bf16.mxu0 %v1007
    %1311 = vmatpush2.bf16.msra.mxu0 %v1006
    %1312 = vmatprep.subr.bf16.mxu0 %v1003
    %1313 = vmatpush2.bf16.msra.mxu0 %v1002
    %1314 = vmatprep.subr.bf16.mxu0 %v999
    %1315 = vmatpush2.bf16.msra.mxu0 %v998
    %1316 = vmatprep.subr.bf16.mxu0 %v995
    %1317 = vmatpush2.bf16.msra.mxu0 %v994
    %1318 = vmatprep.subr.bf16.mxu0 %v991
    %1319 = vmatpush2.bf16.msra.mxu0 %v990
    %1320 = vmatprep.subr.bf16.mxu0 %v987
    %1321 = vmatpush2.bf16.msra.mxu0 %v986
    %1322 = vmatprep.mubr.bf16.mxu0 %v415
    %1323 = vmatmul.mubr.bf16.gmra.mxu0 %v414
    %v1324 = vpop.f32.mrf.mxu0
    %v1325 = vadd.f32 %v559, %v1324
    %v1326 = vpop.f32.mrf.mxu0
    %v1327 = vadd.f32 %v563, %v1326
    %v1328 = vpop.f32.mrf.mxu0
    %v1329 = vpop.f32.mrf.mxu0
    %1330 = vdwg.mxu0
    %1331 = vmatprep.subr.bf16.mxu0 %v1047
    %1332 = vmatpush1.bf16.msra.mxu0 %v1046
    %1333 = vmatprep.subr.bf16.mxu0 %v1043
    %1334 = vmatpush1.bf16.msra.mxu0 %v1042
    %1335 = vmatprep.subr.bf16.mxu0 %v1039
    %1336 = vmatpush1.bf16.msra.mxu0 %v1038
    %1337 = vmatprep.subr.bf16.mxu0 %v1035
    %1338 = vmatpush1.bf16.msra.mxu0 %v1034
    %1339 = vmatprep.subr.bf16.mxu0 %v1031
    %1340 = vmatpush1.bf16.msra.mxu0 %v1030
    %1341 = vmatprep.subr.bf16.mxu0 %v1027
    %1342 = vmatpush1.bf16.msra.mxu0 %v1026
    %1343 = vmatprep.subr.bf16.mxu0 %v1023
    %1344 = vmatpush1.bf16.msra.mxu0 %v1022
    %1345 = vmatprep.subr.bf16.mxu0 %v1019
    %1346 = vmatpush1.bf16.msra.mxu0 %v1018
    %1347 = vmatprep.subr.bf16.mxu0 %v1079
    %1348 = vmatpush2.bf16.msra.mxu0 %v1078
    %1349 = vmatprep.subr.bf16.mxu0 %v1075
    %1350 = vmatpush2.bf16.msra.mxu0 %v1074
    %1351 = vmatprep.subr.bf16.mxu0 %v1071
    %1352 = vmatpush2.bf16.msra.mxu0 %v1070
    %1353 = vmatprep.subr.bf16.mxu0 %v1067
    %1354 = vmatpush2.bf16.msra.mxu0 %v1066
    %1355 = vmatprep.subr.bf16.mxu0 %v1063
    %1356 = vmatpush2.bf16.msra.mxu0 %v1062
    %1357 = vmatprep.subr.bf16.mxu0 %v1059
    %1358 = vmatpush2.bf16.msra.mxu0 %v1058
    %1359 = vmatprep.subr.bf16.mxu0 %v1055
    %1360 = vmatpush2.bf16.msra.mxu0 %v1054
    %1361 = vmatprep.subr.bf16.mxu0 %v1051
    %1362 = vmatpush2.bf16.msra.mxu0 %v1050
    %1363 = vmatprep.mubr.bf16.mxu0 %v417
    %1364 = vmatmul.mubr.bf16.gmra.mxu0 %v416
    %v1365 = vpop.f32.mrf.mxu0
    %v1366 = vadd.f32 %v1325, %v1365
    %v1367 = vpop.f32.mrf.mxu0
    %v1368 = vadd.f32 %v1327, %v1367
    %v1369 = vpop.f32.mrf.mxu0
    %v1370 = vpop.f32.mrf.mxu0
    %1371 = vdwg.mxu0
    %v1372 = vmax.f32 %v1284, 0.0
    %v1373 = vmax.f32 %v1286, 0.0
    %v1374 = vmax.f32 %v1366, 0.0
    %v1375 = vmax.f32 %v1368, 0.0
    %v1376 = vpack.c.bf16 %v1372, %v1372
    %v1377 = vpack.c.bf16 %v1373, %v1373
    %v1378 = vpack.c.bf16 %v1374, %v1374
    %v1379 = vpack.c.bf16 %v1375, %v1375
    %v1380 = vld [vmem:[#allocation10] sm:$0xff]
    %v1381 = vld [vmem:[#allocation10 + $0x8] sm:$0xff]
    %v1382 = vld [vmem:[#allocation10 + $0x10] sm:$0xff]
    %v1383 = vld [vmem:[#allocation10 + $0x18] sm:$0xff]
    %v1384 = vld [vmem:[#allocation10 + $0x20] sm:$0xff]
    %v1385 = vld [vmem:[#allocation10 + $0x28] sm:$0xff]
    %v1386 = vld [vmem:[#allocation10 + $0x30] sm:$0xff]
    %v1387 = vld [vmem:[#allocation10 + $0x38] sm:$0xff]
    %v1388 = vld [vmem:[#allocation10 + $0x40] sm:$0xff]
    %v1389 = vld [vmem:[#allocation10 + $0x48] sm:$0xff]
    %v1390 = vld [vmem:[#allocation10 + $0x50] sm:$0xff]
    %v1391 = vld [vmem:[#allocation10 + $0x58] sm:$0xff]
    %v1392 = vld [vmem:[#allocation10 + $0x60] sm:$0xff]
    %v1393 = vld [vmem:[#allocation10 + $0x68] sm:$0xff]
    %v1394 = vld [vmem:[#allocation10 + $0x70] sm:$0xff]
    %v1395 = vld [vmem:[#allocation10 + $0x78] sm:$0xff]
    %v1396 = vld [vmem:[#allocation10 + $0x80] sm:$0xff]
    %v1397 = vld [vmem:[#allocation10 + $0x88] sm:$0xff]
    %v1398 = vld [vmem:[#allocation10 + $0x90] sm:$0xff]
    %v1399 = vld [vmem:[#allocation10 + $0x98] sm:$0xff]
    %v1400 = vld [vmem:[#allocation10 + $0xa0] sm:$0xff]
    %v1401 = vld [vmem:[#allocation10 + $0xa8] sm:$0xff]
    %v1402 = vld [vmem:[#allocation10 + $0xb0] sm:$0xff]
    %v1403 = vld [vmem:[#allocation10 + $0xb8] sm:$0xff]
    %v1404 = vld [vmem:[#allocation10 + $0xc0] sm:$0xff]
    %v1405 = vld [vmem:[#allocation10 + $0xc8] sm:$0xff]
    %v1406 = vld [vmem:[#allocation10 + $0xd0] sm:$0xff]
    %v1407 = vld [vmem:[#allocation10 + $0xd8] sm:$0xff]
    %v1408 = vld [vmem:[#allocation10 + $0xe0] sm:$0xff]
    %v1409 = vld [vmem:[#allocation10 + $0xe8] sm:$0xff]
    %v1410 = vld [vmem:[#allocation10 + $0xf0] sm:$0xff]
    %v1411 = vld [vmem:[#allocation10 + $0xf8] sm:$0xff]
    %v1412 = vld [vmem:[#allocation10 + $0x100] sm:$0xff]
    %v1413 = vld [vmem:[#allocation10 + $0x108] sm:$0xff]
    %v1414 = vld [vmem:[#allocation10 + $0x110] sm:$0xff]
    %v1415 = vld [vmem:[#allocation10 + $0x118] sm:$0xff]
    %v1416 = vld [vmem:[#allocation10 + $0x120] sm:$0xff]
    %v1417 = vld [vmem:[#allocation10 + $0x128] sm:$0xff]
    %v1418 = vld [vmem:[#allocation10 + $0x130] sm:$0xff]
    %v1419 = vld [vmem:[#allocation10 + $0x138] sm:$0xff]
    %v1420 = vld [vmem:[#allocation10 + $0x140] sm:$0xff]
    %v1421 = vld [vmem:[#allocation10 + $0x148] sm:$0xff]
    %v1422 = vld [vmem:[#allocation10 + $0x150] sm:$0xff]
    %v1423 = vld [vmem:[#allocation10 + $0x158] sm:$0xff]
    %v1424 = vld [vmem:[#allocation10 + $0x160] sm:$0xff]
    %v1425 = vld [vmem:[#allocation10 + $0x168] sm:$0xff]
    %v1426 = vld [vmem:[#allocation10 + $0x170] sm:$0xff]
    %v1427 = vld [vmem:[#allocation10 + $0x178] sm:$0xff]
    %v1428 = vld [vmem:[#allocation10 + $0x180] sm:$0xff]
    %v1429 = vld [vmem:[#allocation10 + $0x188] sm:$0xff]
    %v1430 = vld [vmem:[#allocation10 + $0x190] sm:$0xff]
    %v1431 = vld [vmem:[#allocation10 + $0x198] sm:$0xff]
    %v1432 = vld [vmem:[#allocation10 + $0x1a0] sm:$0xff]
    %v1433 = vld [vmem:[#allocation10 + $0x1a8] sm:$0xff]
    %v1434 = vld [vmem:[#allocation10 + $0x1b0] sm:$0xff]
    %v1435 = vld [vmem:[#allocation10 + $0x1b8] sm:$0xff]
    %v1436 = vld [vmem:[#allocation10 + $0x1c0] sm:$0xff]
    %v1437 = vld [vmem:[#allocation10 + $0x1c8] sm:$0xff]
    %v1438 = vld [vmem:[#allocation10 + $0x1d0] sm:$0xff]
    %v1439 = vld [vmem:[#allocation10 + $0x1d8] sm:$0xff]
    %v1440 = vld [vmem:[#allocation10 + $0x1e0] sm:$0xff]
    %v1441 = vld [vmem:[#allocation10 + $0x1e8] sm:$0xff]
    %v1442 = vld [vmem:[#allocation10 + $0x1f0] sm:$0xff]
    %v1443 = vld [vmem:[#allocation10 + $0x1f8] sm:$0xff]
    %v1444 = vld [vmem:[#allocation10 + $0x200] sm:$0xff]
    %v1445 = vld [vmem:[#allocation10 + $0x208] sm:$0xff]
    %v1446 = vld [vmem:[#allocation10 + $0x210] sm:$0xff]
    %v1447 = vld [vmem:[#allocation10 + $0x218] sm:$0xff]
    %v1448 = vld [vmem:[#allocation10 + $0x220] sm:$0xff]
    %v1449 = vld [vmem:[#allocation10 + $0x228] sm:$0xff]
    %v1450 = vld [vmem:[#allocation10 + $0x230] sm:$0xff]
    %v1451 = vld [vmem:[#allocation10 + $0x238] sm:$0xff]
    %v1452 = vld [vmem:[#allocation10 + $0x240] sm:$0xff]
    %v1453 = vld [vmem:[#allocation10 + $0x248] sm:$0xff]
    %v1454 = vld [vmem:[#allocation10 + $0x250] sm:$0xff]
    %v1455 = vld [vmem:[#allocation10 + $0x258] sm:$0xff]
    %v1456 = vld [vmem:[#allocation10 + $0x260] sm:$0xff]
    %v1457 = vld [vmem:[#allocation10 + $0x268] sm:$0xff]
    %v1458 = vld [vmem:[#allocation10 + $0x270] sm:$0xff]
    %v1459 = vld [vmem:[#allocation10 + $0x278] sm:$0xff]
    %v1460 = vld [vmem:[#allocation10 + $0x280] sm:$0xff]
    %v1461 = vld [vmem:[#allocation10 + $0x288] sm:$0xff]
    %v1462 = vld [vmem:[#allocation10 + $0x290] sm:$0xff]
    %v1463 = vld [vmem:[#allocation10 + $0x298] sm:$0xff]
    %v1464 = vld [vmem:[#allocation10 + $0x2a0] sm:$0xff]
    %v1465 = vld [vmem:[#allocation10 + $0x2a8] sm:$0xff]
    %v1466 = vld [vmem:[#allocation10 + $0x2b0] sm:$0xff]
    %v1467 = vld [vmem:[#allocation10 + $0x2b8] sm:$0xff]
    %v1468 = vld [vmem:[#allocation10 + $0x2c0] sm:$0xff]
    %v1469 = vld [vmem:[#allocation10 + $0x2c8] sm:$0xff]
    %v1470 = vld [vmem:[#allocation10 + $0x2d0] sm:$0xff]
    %v1471 = vld [vmem:[#allocation10 + $0x2d8] sm:$0xff]
    %v1472 = vld [vmem:[#allocation10 + $0x2e0] sm:$0xff]
    %v1473 = vld [vmem:[#allocation10 + $0x2e8] sm:$0xff]
    %v1474 = vld [vmem:[#allocation10 + $0x2f0] sm:$0xff]
    %v1475 = vld [vmem:[#allocation10 + $0x2f8] sm:$0xff]
    %v1476 = vld [vmem:[#allocation10 + $0x300] sm:$0xff]
    %v1477 = vld [vmem:[#allocation10 + $0x308] sm:$0xff]
    %v1478 = vld [vmem:[#allocation10 + $0x310] sm:$0xff]
    %v1479 = vld [vmem:[#allocation10 + $0x318] sm:$0xff]
    %v1480 = vld [vmem:[#allocation10 + $0x320] sm:$0xff]
    %v1481 = vld [vmem:[#allocation10 + $0x328] sm:$0xff]
    %v1482 = vld [vmem:[#allocation10 + $0x330] sm:$0xff]
    %v1483 = vld [vmem:[#allocation10 + $0x338] sm:$0xff]
    %v1484 = vld [vmem:[#allocation10 + $0x340] sm:$0xff]
    %v1485 = vld [vmem:[#allocation10 + $0x348] sm:$0xff]
    %v1486 = vld [vmem:[#allocation10 + $0x350] sm:$0xff]
    %v1487 = vld [vmem:[#allocation10 + $0x358] sm:$0xff]
    %v1488 = vld [vmem:[#allocation10 + $0x360] sm:$0xff]
    %v1489 = vld [vmem:[#allocation10 + $0x368] sm:$0xff]
    %v1490 = vld [vmem:[#allocation10 + $0x370] sm:$0xff]
    %v1491 = vld [vmem:[#allocation10 + $0x378] sm:$0xff]
    %v1492 = vld [vmem:[#allocation10 + $0x380] sm:$0xff]
    %v1493 = vld [vmem:[#allocation10 + $0x388] sm:$0xff]
    %v1494 = vld [vmem:[#allocation10 + $0x390] sm:$0xff]
    %v1495 = vld [vmem:[#allocation10 + $0x398] sm:$0xff]
    %v1496 = vld [vmem:[#allocation10 + $0x3a0] sm:$0xff]
    %v1497 = vld [vmem:[#allocation10 + $0x3a8] sm:$0xff]
    %v1498 = vld [vmem:[#allocation10 + $0x3b0] sm:$0xff]
    %v1499 = vld [vmem:[#allocation10 + $0x3b8] sm:$0xff]
    %v1500 = vld [vmem:[#allocation10 + $0x3c0] sm:$0xff]
    %v1501 = vld [vmem:[#allocation10 + $0x3c8] sm:$0xff]
    %v1502 = vld [vmem:[#allocation10 + $0x3d0] sm:$0xff]
    %v1503 = vld [vmem:[#allocation10 + $0x3d8] sm:$0xff]
    %v1504 = vld [vmem:[#allocation10 + $0x3e0] sm:$0xff]
    %v1505 = vld [vmem:[#allocation10 + $0x3e8] sm:$0xff]
    %v1506 = vld [vmem:[#allocation10 + $0x3f0] sm:$0xff]
    %v1507 = vld [vmem:[#allocation10 + $0x3f8] sm:$0xff]
    %v1508 = vld [vmem:[%s6] sm:$0xf]
    %v1510 = vlaneseq
    %v1511 = vshrl.u32 %v1510, 7
    %v1512 = vsub.s32 0, %v1511
    %v1513 = vrot.slane %v1508, %v1512
    %v1514 = vlaneseq
    %v1515 = vshrl.u32 %v1514, 7
    %v1516 = vsub.s32 1, %v1515
    %v1517 = vrot.slane %v1508, %v1516
    %v1518 = vlaneseq
    %v1519 = vshrl.u32 %v1518, 7
    %v1520 = vsub.s32 2, %v1519
    %v1521 = vrot.slane %v1508, %v1520
    %v1522 = vlaneseq
    %v1523 = vshrl.u32 %v1522, 7
    %v1524 = vsub.s32 3, %v1523
    %v1525 = vrot.slane %v1508, %v1524
    %v1658 = vunpack.c.l.b16 %v1380
    %v1659 = vunpack.c.h.b16 %v1380
    %v1660 = vunpack.c.l.b16 %v1381
    %v1661 = vunpack.c.h.b16 %v1381
    %v1662 = vunpack.c.l.b16 %v1382
    %v1663 = vunpack.c.h.b16 %v1382
    %v1664 = vunpack.c.l.b16 %v1383
    %v1665 = vunpack.c.h.b16 %v1383
    %v1666 = vunpack.c.l.b16 %v1384
    %v1667 = vunpack.c.h.b16 %v1384
    %v1668 = vunpack.c.l.b16 %v1385
    %v1669 = vunpack.c.h.b16 %v1385
    %v1670 = vunpack.c.l.b16 %v1386
    %v1671 = vunpack.c.h.b16 %v1386
    %v1672 = vunpack.c.l.b16 %v1387
    %v1673 = vunpack.c.h.b16 %v1387
    %v1674 = vunpack.c.l.b16 %v1388
    %v1675 = vunpack.c.h.b16 %v1388
    %v1676 = vunpack.c.l.b16 %v1389
    %v1677 = vunpack.c.h.b16 %v1389
    %v1678 = vunpack.c.l.b16 %v1390
    %v1679 = vunpack.c.h.b16 %v1390
    %v1680 = vunpack.c.l.b16 %v1391
    %v1681 = vunpack.c.h.b16 %v1391
    %v1682 = vunpack.c.l.b16 %v1392
    %v1683 = vunpack.c.h.b16 %v1392
    %v1684 = vunpack.c.l.b16 %v1393
    %v1685 = vunpack.c.h.b16 %v1393
    %v1686 = vunpack.c.l.b16 %v1394
    %v1687 = vunpack.c.h.b16 %v1394
    %v1688 = vunpack.c.l.b16 %v1395
    %v1689 = vunpack.c.h.b16 %v1395
    %v1690 = vunpack.c.l.b16 %v1396
    %v1691 = vunpack.c.h.b16 %v1396
    %v1692 = vunpack.c.l.b16 %v1397
    %v1693 = vunpack.c.h.b16 %v1397
    %v1694 = vunpack.c.l.b16 %v1398
    %v1695 = vunpack.c.h.b16 %v1398
    %v1696 = vunpack.c.l.b16 %v1399
    %v1697 = vunpack.c.h.b16 %v1399
    %v1698 = vunpack.c.l.b16 %v1400
    %v1699 = vunpack.c.h.b16 %v1400
    %v1700 = vunpack.c.l.b16 %v1401
    %v1701 = vunpack.c.h.b16 %v1401
    %v1702 = vunpack.c.l.b16 %v1402
    %v1703 = vunpack.c.h.b16 %v1402
    %v1704 = vunpack.c.l.b16 %v1403
    %v1705 = vunpack.c.h.b16 %v1403
    %v1706 = vunpack.c.l.b16 %v1404
    %v1707 = vunpack.c.h.b16 %v1404
    %v1708 = vunpack.c.l.b16 %v1405
    %v1709 = vunpack.c.h.b16 %v1405
    %v1710 = vunpack.c.l.b16 %v1406
    %v1711 = vunpack.c.h.b16 %v1406
    %v1712 = vunpack.c.l.b16 %v1407
    %v1713 = vunpack.c.h.b16 %v1407
    %v1714 = vunpack.c.l.b16 %v1408
    %v1715 = vunpack.c.h.b16 %v1408
    %v1716 = vunpack.c.l.b16 %v1409
    %v1717 = vunpack.c.h.b16 %v1409
    %v1718 = vunpack.c.l.b16 %v1410
    %v1719 = vunpack.c.h.b16 %v1410
    %v1720 = vunpack.c.l.b16 %v1411
    %v1721 = vunpack.c.h.b16 %v1411
    %v1722 = vunpack.c.l.b16 %v1412
    %v1723 = vunpack.c.h.b16 %v1412
    %v1724 = vunpack.c.l.b16 %v1413
    %v1725 = vunpack.c.h.b16 %v1413
    %v1726 = vunpack.c.l.b16 %v1414
    %v1727 = vunpack.c.h.b16 %v1414
    %v1728 = vunpack.c.l.b16 %v1415
    %v1729 = vunpack.c.h.b16 %v1415
    %v1730 = vunpack.c.l.b16 %v1416
    %v1731 = vunpack.c.h.b16 %v1416
    %v1732 = vunpack.c.l.b16 %v1417
    %v1733 = vunpack.c.h.b16 %v1417
    %v1734 = vunpack.c.l.b16 %v1418
    %v1735 = vunpack.c.h.b16 %v1418
    %v1736 = vunpack.c.l.b16 %v1419
    %v1737 = vunpack.c.h.b16 %v1419
    %v1738 = vunpack.c.l.b16 %v1420
    %v1739 = vunpack.c.h.b16 %v1420
    %v1740 = vunpack.c.l.b16 %v1421
    %v1741 = vunpack.c.h.b16 %v1421
    %v1742 = vunpack.c.l.b16 %v1422
    %v1743 = vunpack.c.h.b16 %v1422
    %v1744 = vunpack.c.l.b16 %v1423
    %v1745 = vunpack.c.h.b16 %v1423
    %v1746 = vunpack.c.l.b16 %v1424
    %v1747 = vunpack.c.h.b16 %v1424
    %v1748 = vunpack.c.l.b16 %v1425
    %v1749 = vunpack.c.h.b16 %v1425
    %v1750 = vunpack.c.l.b16 %v1426
    %v1751 = vunpack.c.h.b16 %v1426
    %v1752 = vunpack.c.l.b16 %v1427
    %v1753 = vunpack.c.h.b16 %v1427
    %v1754 = vunpack.c.l.b16 %v1428
    %v1755 = vunpack.c.h.b16 %v1428
    %v1756 = vunpack.c.l.b16 %v1429
    %v1757 = vunpack.c.h.b16 %v1429
    %v1758 = vunpack.c.l.b16 %v1430
    %v1759 = vunpack.c.h.b16 %v1430
    %v1760 = vunpack.c.l.b16 %v1431
    %v1761 = vunpack.c.h.b16 %v1431
    %v1762 = vunpack.c.l.b16 %v1432
    %v1763 = vunpack.c.h.b16 %v1432
    %v1764 = vunpack.c.l.b16 %v1433
    %v1765 = vunpack.c.h.b16 %v1433
    %v1766 = vunpack.c.l.b16 %v1434
    %v1767 = vunpack.c.h.b16 %v1434
    %v1768 = vunpack.c.l.b16 %v1435
    %v1769 = vunpack.c.h.b16 %v1435
    %v1770 = vunpack.c.l.b16 %v1436
    %v1771 = vunpack.c.h.b16 %v1436
    %v1772 = vunpack.c.l.b16 %v1437
    %v1773 = vunpack.c.h.b16 %v1437
    %v1774 = vunpack.c.l.b16 %v1438
    %v1775 = vunpack.c.h.b16 %v1438
    %v1776 = vunpack.c.l.b16 %v1439
    %v1777 = vunpack.c.h.b16 %v1439
    %v1778 = vunpack.c.l.b16 %v1440
    %v1779 = vunpack.c.h.b16 %v1440
    %v1780 = vunpack.c.l.b16 %v1441
    %v1781 = vunpack.c.h.b16 %v1441
    %v1782 = vunpack.c.l.b16 %v1442
    %v1783 = vunpack.c.h.b16 %v1442
    %v1784 = vunpack.c.l.b16 %v1443
    %v1785 = vunpack.c.h.b16 %v1443
    %v1786 = vunpack.c.l.b16 %v1444
    %v1787 = vunpack.c.h.b16 %v1444
    %v1788 = vunpack.c.l.b16 %v1445
    %v1789 = vunpack.c.h.b16 %v1445
    %v1790 = vunpack.c.l.b16 %v1446
    %v1791 = vunpack.c.h.b16 %v1446
    %v1792 = vunpack.c.l.b16 %v1447
    %v1793 = vunpack.c.h.b16 %v1447
    %v1794 = vunpack.c.l.b16 %v1448
    %v1795 = vunpack.c.h.b16 %v1448
    %v1796 = vunpack.c.l.b16 %v1449
    %v1797 = vunpack.c.h.b16 %v1449
    %v1798 = vunpack.c.l.b16 %v1450
    %v1799 = vunpack.c.h.b16 %v1450
    %v1800 = vunpack.c.l.b16 %v1451
    %v1801 = vunpack.c.h.b16 %v1451
    %v1802 = vunpack.c.l.b16 %v1452
    %v1803 = vunpack.c.h.b16 %v1452
    %v1804 = vunpack.c.l.b16 %v1453
    %v1805 = vunpack.c.h.b16 %v1453
    %v1806 = vunpack.c.l.b16 %v1454
    %v1807 = vunpack.c.h.b16 %v1454
    %v1808 = vunpack.c.l.b16 %v1455
    %v1809 = vunpack.c.h.b16 %v1455
    %v1810 = vunpack.c.l.b16 %v1456
    %v1811 = vunpack.c.h.b16 %v1456
    %v1812 = vunpack.c.l.b16 %v1457
    %v1813 = vunpack.c.h.b16 %v1457
    %v1814 = vunpack.c.l.b16 %v1458
    %v1815 = vunpack.c.h.b16 %v1458
    %v1816 = vunpack.c.l.b16 %v1459
    %v1817 = vunpack.c.h.b16 %v1459
    %v1818 = vunpack.c.l.b16 %v1460
    %v1819 = vunpack.c.h.b16 %v1460
    %v1820 = vunpack.c.l.b16 %v1461
    %v1821 = vunpack.c.h.b16 %v1461
    %v1822 = vunpack.c.l.b16 %v1462
    %v1823 = vunpack.c.h.b16 %v1462
    %v1824 = vunpack.c.l.b16 %v1463
    %v1825 = vunpack.c.h.b16 %v1463
    %v1826 = vunpack.c.l.b16 %v1464
    %v1827 = vunpack.c.h.b16 %v1464
    %v1828 = vunpack.c.l.b16 %v1465
    %v1829 = vunpack.c.h.b16 %v1465
    %v1830 = vunpack.c.l.b16 %v1466
    %v1831 = vunpack.c.h.b16 %v1466
    %v1832 = vunpack.c.l.b16 %v1467
    %v1833 = vunpack.c.h.b16 %v1467
    %v1834 = vunpack.c.l.b16 %v1468
    %v1835 = vunpack.c.h.b16 %v1468
    %v1836 = vunpack.c.l.b16 %v1469
    %v1837 = vunpack.c.h.b16 %v1469
    %v1838 = vunpack.c.l.b16 %v1470
    %v1839 = vunpack.c.h.b16 %v1470
    %v1840 = vunpack.c.l.b16 %v1471
    %v1841 = vunpack.c.h.b16 %v1471
    %v1842 = vunpack.c.l.b16 %v1472
    %v1843 = vunpack.c.h.b16 %v1472
    %v1844 = vunpack.c.l.b16 %v1473
    %v1845 = vunpack.c.h.b16 %v1473
    %v1846 = vunpack.c.l.b16 %v1474
    %v1847 = vunpack.c.h.b16 %v1474
    %v1848 = vunpack.c.l.b16 %v1475
    %v1849 = vunpack.c.h.b16 %v1475
    %v1850 = vunpack.c.l.b16 %v1476
    %v1851 = vunpack.c.h.b16 %v1476
    %v1852 = vunpack.c.l.b16 %v1477
    %v1853 = vunpack.c.h.b16 %v1477
    %v1854 = vunpack.c.l.b16 %v1478
    %v1855 = vunpack.c.h.b16 %v1478
    %v1856 = vunpack.c.l.b16 %v1479
    %v1857 = vunpack.c.h.b16 %v1479
    %v1858 = vunpack.c.l.b16 %v1480
    %v1859 = vunpack.c.h.b16 %v1480
    %v1860 = vunpack.c.l.b16 %v1481
    %v1861 = vunpack.c.h.b16 %v1481
    %v1862 = vunpack.c.l.b16 %v1482
    %v1863 = vunpack.c.h.b16 %v1482
    %v1864 = vunpack.c.l.b16 %v1483
    %v1865 = vunpack.c.h.b16 %v1483
    %v1866 = vunpack.c.l.b16 %v1484
    %v1867 = vunpack.c.h.b16 %v1484
    %v1868 = vunpack.c.l.b16 %v1485
    %v1869 = vunpack.c.h.b16 %v1485
    %v1870 = vunpack.c.l.b16 %v1486
    %v1871 = vunpack.c.h.b16 %v1486
    %v1872 = vunpack.c.l.b16 %v1487
    %v1873 = vunpack.c.h.b16 %v1487
    %v1874 = vunpack.c.l.b16 %v1488
    %v1875 = vunpack.c.h.b16 %v1488
    %v1876 = vunpack.c.l.b16 %v1489
    %v1877 = vunpack.c.h.b16 %v1489
    %v1878 = vunpack.c.l.b16 %v1490
    %v1879 = vunpack.c.h.b16 %v1490
    %v1880 = vunpack.c.l.b16 %v1491
    %v1881 = vunpack.c.h.b16 %v1491
    %v1882 = vunpack.c.l.b16 %v1492
    %v1883 = vunpack.c.h.b16 %v1492
    %v1884 = vunpack.c.l.b16 %v1493
    %v1885 = vunpack.c.h.b16 %v1493
    %v1886 = vunpack.c.l.b16 %v1494
    %v1887 = vunpack.c.h.b16 %v1494
    %v1888 = vunpack.c.l.b16 %v1495
    %v1889 = vunpack.c.h.b16 %v1495
    %v1890 = vunpack.c.l.b16 %v1496
    %v1891 = vunpack.c.h.b16 %v1496
    %v1892 = vunpack.c.l.b16 %v1497
    %v1893 = vunpack.c.h.b16 %v1497
    %v1894 = vunpack.c.l.b16 %v1498
    %v1895 = vunpack.c.h.b16 %v1498
    %v1896 = vunpack.c.l.b16 %v1499
    %v1897 = vunpack.c.h.b16 %v1499
    %v1898 = vunpack.c.l.b16 %v1500
    %v1899 = vunpack.c.h.b16 %v1500
    %v1900 = vunpack.c.l.b16 %v1501
    %v1901 = vunpack.c.h.b16 %v1501
    %v1902 = vunpack.c.l.b16 %v1502
    %v1903 = vunpack.c.h.b16 %v1502
    %v1904 = vunpack.c.l.b16 %v1503
    %v1905 = vunpack.c.h.b16 %v1503
    %v1906 = vunpack.c.l.b16 %v1504
    %v1907 = vunpack.c.h.b16 %v1504
    %v1908 = vunpack.c.l.b16 %v1505
    %v1909 = vunpack.c.h.b16 %v1505
    %v1910 = vunpack.c.l.b16 %v1506
    %v1911 = vunpack.c.h.b16 %v1506
    %v1912 = vunpack.c.l.b16 %v1507
    %v1913 = vunpack.c.h.b16 %v1507
    %v1914 = vpack.c.b16 %v1662, %v1658
    %v1915 = vpack.c.b16 %v1663, %v1659
    %v1916 = vpack.c.b16 %v1664, %v1660
    %v1917 = vpack.c.b16 %v1665, %v1661
    %v1918 = vpack.c.b16 %v1670, %v1666
    %v1919 = vpack.c.b16 %v1671, %v1667
    %v1920 = vpack.c.b16 %v1672, %v1668
    %v1921 = vpack.c.b16 %v1673, %v1669
    %v1922 = vpack.c.b16 %v1678, %v1674
    %v1923 = vpack.c.b16 %v1679, %v1675
    %v1924 = vpack.c.b16 %v1680, %v1676
    %v1925 = vpack.c.b16 %v1681, %v1677
    %v1926 = vpack.c.b16 %v1686, %v1682
    %v1927 = vpack.c.b16 %v1687, %v1683
    %v1928 = vpack.c.b16 %v1688, %v1684
    %v1929 = vpack.c.b16 %v1689, %v1685
    %v1930 = vpack.c.b16 %v1694, %v1690
    %v1931 = vpack.c.b16 %v1695, %v1691
    %v1932 = vpack.c.b16 %v1696, %v1692
    %v1933 = vpack.c.b16 %v1697, %v1693
    %v1934 = vpack.c.b16 %v1702, %v1698
    %v1935 = vpack.c.b16 %v1703, %v1699
    %v1936 = vpack.c.b16 %v1704, %v1700
    %v1937 = vpack.c.b16 %v1705, %v1701
    %v1938 = vpack.c.b16 %v1710, %v1706
    %v1939 = vpack.c.b16 %v1711, %v1707
    %v1940 = vpack.c.b16 %v1712, %v1708
    %v1941 = vpack.c.b16 %v1713, %v1709
    %v1942 = vpack.c.b16 %v1718, %v1714
    %v1943 = vpack.c.b16 %v1719, %v1715
    %v1944 = vpack.c.b16 %v1720, %v1716
    %v1945 = vpack.c.b16 %v1721, %v1717
    %v1946 = vpack.c.b16 %v1726, %v1722
    %v1947 = vpack.c.b16 %v1727, %v1723
    %v1948 = vpack.c.b16 %v1728, %v1724
    %v1949 = vpack.c.b16 %v1729, %v1725
    %v1950 = vpack.c.b16 %v1734, %v1730
    %v1951 = vpack.c.b16 %v1735, %v1731
    %v1952 = vpack.c.b16 %v1736, %v1732
    %v1953 = vpack.c.b16 %v1737, %v1733
    %v1954 = vpack.c.b16 %v1742, %v1738
    %v1955 = vpack.c.b16 %v1743, %v1739
    %v1956 = vpack.c.b16 %v1744, %v1740
    %v1957 = vpack.c.b16 %v1745, %v1741
    %v1958 = vpack.c.b16 %v1750, %v1746
    %v1959 = vpack.c.b16 %v1751, %v1747
    %v1960 = vpack.c.b16 %v1752, %v1748
    %v1961 = vpack.c.b16 %v1753, %v1749
    %v1962 = vpack.c.b16 %v1758, %v1754
    %v1963 = vpack.c.b16 %v1759, %v1755
    %v1964 = vpack.c.b16 %v1760, %v1756
    %v1965 = vpack.c.b16 %v1761, %v1757
    %v1966 = vpack.c.b16 %v1766, %v1762
    %v1967 = vpack.c.b16 %v1767, %v1763
    %v1968 = vpack.c.b16 %v1768, %v1764
    %v1969 = vpack.c.b16 %v1769, %v1765
    %v1970 = vpack.c.b16 %v1774, %v1770
    %v1971 = vpack.c.b16 %v1775, %v1771
    %v1972 = vpack.c.b16 %v1776, %v1772
    %v1973 = vpack.c.b16 %v1777, %v1773
    %v1974 = vpack.c.b16 %v1782, %v1778
    %v1975 = vpack.c.b16 %v1783, %v1779
    %v1976 = vpack.c.b16 %v1784, %v1780
    %v1977 = vpack.c.b16 %v1785, %v1781
    %v1978 = vpack.c.b16 %v1790, %v1786
    %v1979 = vpack.c.b16 %v1791, %v1787
    %v1980 = vpack.c.b16 %v1792, %v1788
    %v1981 = vpack.c.b16 %v1793, %v1789
    %v1982 = vpack.c.b16 %v1798, %v1794
    %v1983 = vpack.c.b16 %v1799, %v1795
    %v1984 = vpack.c.b16 %v1800, %v1796
    %v1985 = vpack.c.b16 %v1801, %v1797
    %v1986 = vpack.c.b16 %v1806, %v1802
    %v1987 = vpack.c.b16 %v1807, %v1803
    %v1988 = vpack.c.b16 %v1808, %v1804
    %v1989 = vpack.c.b16 %v1809, %v1805
    %v1990 = vpack.c.b16 %v1814, %v1810
    %v1991 = vpack.c.b16 %v1815, %v1811
    %v1992 = vpack.c.b16 %v1816, %v1812
    %v1993 = vpack.c.b16 %v1817, %v1813
    %v1994 = vpack.c.b16 %v1822, %v1818
    %v1995 = vpack.c.b16 %v1823, %v1819
    %v1996 = vpack.c.b16 %v1824, %v1820
    %v1997 = vpack.c.b16 %v1825, %v1821
    %v1998 = vpack.c.b16 %v1830, %v1826
    %v1999 = vpack.c.b16 %v1831, %v1827
    %v2000 = vpack.c.b16 %v1832, %v1828
    %v2001 = vpack.c.b16 %v1833, %v1829
    %v2002 = vpack.c.b16 %v1838, %v1834
    %v2003 = vpack.c.b16 %v1839, %v1835
    %v2004 = vpack.c.b16 %v1840, %v1836
    %v2005 = vpack.c.b16 %v1841, %v1837
    %v2006 = vpack.c.b16 %v1846, %v1842
    %v2007 = vpack.c.b16 %v1847, %v1843
    %v2008 = vpack.c.b16 %v1848, %v1844
    %v2009 = vpack.c.b16 %v1849, %v1845
    %v2010 = vpack.c.b16 %v1854, %v1850
    %v2011 = vpack.c.b16 %v1855, %v1851
    %v2012 = vpack.c.b16 %v1856, %v1852
    %v2013 = vpack.c.b16 %v1857, %v1853
    %v2014 = vpack.c.b16 %v1862, %v1858
    %v2015 = vpack.c.b16 %v1863, %v1859
    %v2016 = vpack.c.b16 %v1864, %v1860
    %v2017 = vpack.c.b16 %v1865, %v1861
    %v2018 = vpack.c.b16 %v1870, %v1866
    %v2019 = vpack.c.b16 %v1871, %v1867
    %v2020 = vpack.c.b16 %v1872, %v1868
    %v2021 = vpack.c.b16 %v1873, %v1869
    %v2022 = vpack.c.b16 %v1878, %v1874
    %v2023 = vpack.c.b16 %v1879, %v1875
    %v2024 = vpack.c.b16 %v1880, %v1876
    %v2025 = vpack.c.b16 %v1881, %v1877
    %v2026 = vpack.c.b16 %v1886, %v1882
    %v2027 = vpack.c.b16 %v1887, %v1883
    %v2028 = vpack.c.b16 %v1888, %v1884
    %v2029 = vpack.c.b16 %v1889, %v1885
    %v2030 = vpack.c.b16 %v1894, %v1890
    %v2031 = vpack.c.b16 %v1895, %v1891
    %v2032 = vpack.c.b16 %v1896, %v1892
    %v2033 = vpack.c.b16 %v1897, %v1893
    %v2034 = vpack.c.b16 %v1902, %v1898
    %v2035 = vpack.c.b16 %v1903, %v1899
    %v2036 = vpack.c.b16 %v1904, %v1900
    %v2037 = vpack.c.b16 %v1905, %v1901
    %v2038 = vpack.c.b16 %v1910, %v1906
    %v2039 = vpack.c.b16 %v1911, %v1907
    %v2040 = vpack.c.b16 %v1912, %v1908
    %v2041 = vpack.c.b16 %v1913, %v1909
    %2170 = vmatprep.subr.bf16.mxu0 %v1943
    %2171 = vmatpush1.bf16.msra.mxu0 %v1942
    %2172 = vmatprep.subr.bf16.mxu0 %v1939
    %2173 = vmatpush1.bf16.msra.mxu0 %v1938
    %2174 = vmatprep.subr.bf16.mxu0 %v1935
    %2175 = vmatpush1.bf16.msra.mxu0 %v1934
    %2176 = vmatprep.subr.bf16.mxu0 %v1931
    %2177 = vmatpush1.bf16.msra.mxu0 %v1930
    %2178 = vmatprep.subr.bf16.mxu0 %v1927
    %2179 = vmatpush1.bf16.msra.mxu0 %v1926
    %2180 = vmatprep.subr.bf16.mxu0 %v1923
    %2181 = vmatpush1.bf16.msra.mxu0 %v1922
    %2182 = vmatprep.subr.bf16.mxu0 %v1919
    %2183 = vmatpush1.bf16.msra.mxu0 %v1918
    %2184 = vmatprep.subr.bf16.mxu0 %v1915
    %2185 = vmatpush1.bf16.msra.mxu0 %v1914
    %2186 = vmatprep.subr.bf16.mxu0 %v1975
    %2187 = vmatpush2.bf16.msra.mxu0 %v1974
    %2188 = vmatprep.subr.bf16.mxu0 %v1971
    %2189 = vmatpush2.bf16.msra.mxu0 %v1970
    %2190 = vmatprep.subr.bf16.mxu0 %v1967
    %2191 = vmatpush2.bf16.msra.mxu0 %v1966
    %2192 = vmatprep.subr.bf16.mxu0 %v1963
    %2193 = vmatpush2.bf16.msra.mxu0 %v1962
    %2194 = vmatprep.subr.bf16.mxu0 %v1959
    %2195 = vmatpush2.bf16.msra.mxu0 %v1958
    %2196 = vmatprep.subr.bf16.mxu0 %v1955
    %2197 = vmatpush2.bf16.msra.mxu0 %v1954
    %2198 = vmatprep.subr.bf16.mxu0 %v1951
    %2199 = vmatpush2.bf16.msra.mxu0 %v1950
    %2200 = vmatprep.subr.bf16.mxu0 %v1947
    %2201 = vmatpush2.bf16.msra.mxu0 %v1946
    %2202 = vmatprep.mubr.bf16.mxu0 %v1377
    %2203 = vmatmul.mubr.bf16.gmra.mxu0 %v1376
    %v2204 = vpop.f32.mrf.mxu0
    %v2205 = vadd.f32 %v1513, %v2204
    %v2206 = vpop.f32.mrf.mxu0
    %v2207 = vadd.f32 %v1517, %v2206
    %v2208 = vpop.f32.mrf.mxu0
    %v2209 = vpop.f32.mrf.mxu0
    %2210 = vdwg.mxu0
    %2211 = vmatprep.subr.bf16.mxu0 %v2007
    %2212 = vmatpush1.bf16.msra.mxu0 %v2006
    %2213 = vmatprep.subr.bf16.mxu0 %v2003
    %2214 = vmatpush1.bf16.msra.mxu0 %v2002
    %2215 = vmatprep.subr.bf16.mxu0 %v1999
    %2216 = vmatpush1.bf16.msra.mxu0 %v1998
    %2217 = vmatprep.subr.bf16.mxu0 %v1995
    %2218 = vmatpush1.bf16.msra.mxu0 %v1994
    %2219 = vmatprep.subr.bf16.mxu0 %v1991
    %2220 = vmatpush1.bf16.msra.mxu0 %v1990
    %2221 = vmatprep.subr.bf16.mxu0 %v1987
    %2222 = vmatpush1.bf16.msra.mxu0 %v1986
    %2223 = vmatprep.subr.bf16.mxu0 %v1983
    %2224 = vmatpush1.bf16.msra.mxu0 %v1982
    %2225 = vmatprep.subr.bf16.mxu0 %v1979
    %2226 = vmatpush1.bf16.msra.mxu0 %v1978
    %2227 = vmatprep.subr.bf16.mxu0 %v2039
    %2228 = vmatpush2.bf16.msra.mxu0 %v2038
    %2229 = vmatprep.subr.bf16.mxu0 %v2035
    %2230 = vmatpush2.bf16.msra.mxu0 %v2034
    %2231 = vmatprep.subr.bf16.mxu0 %v2031
    %2232 = vmatpush2.bf16.msra.mxu0 %v2030
    %2233 = vmatprep.subr.bf16.mxu0 %v2027
    %2234 = vmatpush2.bf16.msra.mxu0 %v2026
    %2235 = vmatprep.subr.bf16.mxu0 %v2023
    %2236 = vmatpush2.bf16.msra.mxu0 %v2022
    %2237 = vmatprep.subr.bf16.mxu0 %v2019
    %2238 = vmatpush2.bf16.msra.mxu0 %v2018
    %2239 = vmatprep.subr.bf16.mxu0 %v2015
    %2240 = vmatpush2.bf16.msra.mxu0 %v2014
    %2241 = vmatprep.subr.bf16.mxu0 %v2011
    %2242 = vmatpush2.bf16.msra.mxu0 %v2010
    %2243 = vmatprep.mubr.bf16.mxu0 %v1379
    %2244 = vmatmul.mubr.bf16.gmra.mxu0 %v1378
    %v2245 = vpop.f32.mrf.mxu0
    %v2246 = vadd.f32 %v2205, %v2245
    %v2247 = vpop.f32.mrf.mxu0
    %v2248 = vadd.f32 %v2207, %v2247
    %v2249 = vpop.f32.mrf.mxu0
    %v2250 = vpop.f32.mrf.mxu0
    %2251 = vdwg.mxu0
    %2252 = vmatprep.subr.bf16.mxu0 %v1945
    %2253 = vmatpush1.bf16.msra.mxu0 %v1944
    %2254 = vmatprep.subr.bf16.mxu0 %v1941
    %2255 = vmatpush1.bf16.msra.mxu0 %v1940
    %2256 = vmatprep.subr.bf16.mxu0 %v1937
    %2257 = vmatpush1.bf16.msra.mxu0 %v1936
    %2258 = vmatprep.subr.bf16.mxu0 %v1933
    %2259 = vmatpush1.bf16.msra.mxu0 %v1932
    %2260 = vmatprep.subr.bf16.mxu0 %v1929
    %2261 = vmatpush1.bf16.msra.mxu0 %v1928
    %2262 = vmatprep.subr.bf16.mxu0 %v1925
    %2263 = vmatpush1.bf16.msra.mxu0 %v1924
    %2264 = vmatprep.subr.bf16.mxu0 %v1921
    %2265 = vmatpush1.bf16.msra.mxu0 %v1920
    %2266 = vmatprep.subr.bf16.mxu0 %v1917
    %2267 = vmatpush1.bf16.msra.mxu0 %v1916
    %2268 = vmatprep.subr.bf16.mxu0 %v1977
    %2269 = vmatpush2.bf16.msra.mxu0 %v1976
    %2270 = vmatprep.subr.bf16.mxu0 %v1973
    %2271 = vmatpush2.bf16.msra.mxu0 %v1972
    %2272 = vmatprep.subr.bf16.mxu0 %v1969
    %2273 = vmatpush2.bf16.msra.mxu0 %v1968
    %2274 = vmatprep.subr.bf16.mxu0 %v1965
    %2275 = vmatpush2.bf16.msra.mxu0 %v1964
    %2276 = vmatprep.subr.bf16.mxu0 %v1961
    %2277 = vmatpush2.bf16.msra.mxu0 %v1960
    %2278 = vmatprep.subr.bf16.mxu0 %v1957
    %2279 = vmatpush2.bf16.msra.mxu0 %v1956
    %2280 = vmatprep.subr.bf16.mxu0 %v1953
    %2281 = vmatpush2.bf16.msra.mxu0 %v1952
    %2282 = vmatprep.subr.bf16.mxu0 %v1949
    %2283 = vmatpush2.bf16.msra.mxu0 %v1948
    %2284 = vmatprep.mubr.bf16.mxu0 %v1377
    %2285 = vmatmul.mubr.bf16.gmra.mxu0 %v1376
    %v2286 = vpop.f32.mrf.mxu0
    %v2287 = vadd.f32 %v1521, %v2286
    %v2288 = vpop.f32.mrf.mxu0
    %v2289 = vadd.f32 %v1525, %v2288
    %v2290 = vpop.f32.mrf.mxu0
    %v2291 = vpop.f32.mrf.mxu0
    %2292 = vdwg.mxu0
    %2293 = vmatprep.subr.bf16.mxu0 %v2009
    %2294 = vmatpush1.bf16.msra.mxu0 %v2008
    %2295 = vmatprep.subr.bf16.mxu0 %v2005
    %2296 = vmatpush1.bf16.msra.mxu0 %v2004
    %2297 = vmatprep.subr.bf16.mxu0 %v2001
    %2298 = vmatpush1.bf16.msra.mxu0 %v2000
    %2299 = vmatprep.subr.bf16.mxu0 %v1997
    %2300 = vmatpush1.bf16.msra.mxu0 %v1996
    %2301 = vmatprep.subr.bf16.mxu0 %v1993
    %2302 = vmatpush1.bf16.msra.mxu0 %v1992
    %2303 = vmatprep.subr.bf16.mxu0 %v1989
    %2304 = vmatpush1.bf16.msra.mxu0 %v1988
    %2305 = vmatprep.subr.bf16.mxu0 %v1985
    %2306 = vmatpush1.bf16.msra.mxu0 %v1984
    %2307 = vmatprep.subr.bf16.mxu0 %v1981
    %2308 = vmatpush1.bf16.msra.mxu0 %v1980
    %2309 = vmatprep.subr.bf16.mxu0 %v2041
    %2310 = vmatpush2.bf16.msra.mxu0 %v2040
    %2311 = vmatprep.subr.bf16.mxu0 %v2037
    %2312 = vmatpush2.bf16.msra.mxu0 %v2036
    %2313 = vmatprep.subr.bf16.mxu0 %v2033
    %2314 = vmatpush2.bf16.msra.mxu0 %v2032
    %2315 = vmatprep.subr.bf16.mxu0 %v2029
    %2316 = vmatpush2.bf16.msra.mxu0 %v2028
    %2317 = vmatprep.subr.bf16.mxu0 %v2025
    %2318 = vmatpush2.bf16.msra.mxu0 %v2024
    %2319 = vmatprep.subr.bf16.mxu0 %v2021
    %2320 = vmatpush2.bf16.msra.mxu0 %v2020
    %2321 = vmatprep.subr.bf16.mxu0 %v2017
    %2322 = vmatpush2.bf16.msra.mxu0 %v2016
    %2323 = vmatprep.subr.bf16.mxu0 %v2013
    %2324 = vmatpush2.bf16.msra.mxu0 %v2012
    %2325 = vmatprep.mubr.bf16.mxu0 %v1379
    %2326 = vmatmul.mubr.bf16.gmra.mxu0 %v1378
    %v2327 = vpop.f32.mrf.mxu0
    %v2328 = vadd.f32 %v2287, %v2327
    %v2329 = vpop.f32.mrf.mxu0
    %v2330 = vadd.f32 %v2289, %v2329
    %v2331 = vpop.f32.mrf.mxu0
    %v2332 = vpop.f32.mrf.mxu0
    %2333 = vdwg.mxu0
    %v2334 = vmax.f32 %v2246, 0.0
    %v2335 = vmax.f32 %v2248, 0.0
    %v2336 = vmax.f32 %v2328, 0.0
    %v2337 = vmax.f32 %v2330, 0.0
    %v2338 = vpack.c.bf16 %v2334, %v2334
    %v2339 = vpack.c.bf16 %v2335, %v2335
    %v2340 = vpack.c.bf16 %v2336, %v2336
    %v2341 = vpack.c.bf16 %v2337, %v2337
    %v2342 = vld [vmem:[#allocation11] sm:$0xf]
    %v2343 = vld [vmem:[#allocation11 + $0x4] sm:$0xf]
    %v2344 = vld [vmem:[#allocation11 + $0x8] sm:$0xf]
    %v2345 = vld [vmem:[#allocation11 + $0xc] sm:$0xf]
    %v2346 = vld [vmem:[#allocation11 + $0x10] sm:$0xf]
    %v2347 = vld [vmem:[#allocation11 + $0x14] sm:$0xf]
    %v2348 = vld [vmem:[#allocation11 + $0x18] sm:$0xf]
    %v2349 = vld [vmem:[#allocation11 + $0x1c] sm:$0xf]
    %v2350 = vld [vmem:[#allocation11 + $0x20] sm:$0xf]
    %v2351 = vld [vmem:[#allocation11 + $0x24] sm:$0xf]
    %v2352 = vld [vmem:[#allocation11 + $0x28] sm:$0xf]
    %v2353 = vld [vmem:[#allocation11 + $0x2c] sm:$0xf]
    %v2354 = vld [vmem:[#allocation11 + $0x30] sm:$0xf]
    %v2355 = vld [vmem:[#allocation11 + $0x34] sm:$0xf]
    %v2356 = vld [vmem:[#allocation11 + $0x38] sm:$0xf]
    %v2357 = vld [vmem:[#allocation11 + $0x3c] sm:$0xf]
    %v2358 = vld [vmem:[#allocation11 + $0x40] sm:$0xf]
    %v2359 = vld [vmem:[#allocation11 + $0x44] sm:$0xf]
    %v2360 = vld [vmem:[#allocation11 + $0x48] sm:$0xf]
    %v2361 = vld [vmem:[#allocation11 + $0x4c] sm:$0xf]
    %v2362 = vld [vmem:[#allocation11 + $0x50] sm:$0xf]
    %v2363 = vld [vmem:[#allocation11 + $0x54] sm:$0xf]
    %v2364 = vld [vmem:[#allocation11 + $0x58] sm:$0xf]
    %v2365 = vld [vmem:[#allocation11 + $0x5c] sm:$0xf]
    %v2366 = vld [vmem:[#allocation11 + $0x60] sm:$0xf]
    %v2367 = vld [vmem:[#allocation11 + $0x64] sm:$0xf]
    %v2368 = vld [vmem:[#allocation11 + $0x68] sm:$0xf]
    %v2369 = vld [vmem:[#allocation11 + $0x6c] sm:$0xf]
    %v2370 = vld [vmem:[#allocation11 + $0x70] sm:$0xf]
    %v2371 = vld [vmem:[#allocation11 + $0x74] sm:$0xf]
    %v2372 = vld [vmem:[#allocation11 + $0x78] sm:$0xf]
    %v2373 = vld [vmem:[#allocation11 + $0x7c] sm:$0xf]
    %v2374 = vld [vmem:[#allocation11 + $0x80] sm:$0xf]
    %v2375 = vld [vmem:[#allocation11 + $0x84] sm:$0xf]
    %v2376 = vld [vmem:[#allocation11 + $0x88] sm:$0xf]
    %v2377 = vld [vmem:[#allocation11 + $0x8c] sm:$0xf]
    %v2378 = vld [vmem:[#allocation11 + $0x90] sm:$0xf]
    %v2379 = vld [vmem:[#allocation11 + $0x94] sm:$0xf]
    %v2380 = vld [vmem:[#allocation11 + $0x98] sm:$0xf]
    %v2381 = vld [vmem:[#allocation11 + $0x9c] sm:$0xf]
    %v2382 = vld [vmem:[#allocation11 + $0xa0] sm:$0xf]
    %v2383 = vld [vmem:[#allocation11 + $0xa4] sm:$0xf]
    %v2384 = vld [vmem:[#allocation11 + $0xa8] sm:$0xf]
    %v2385 = vld [vmem:[#allocation11 + $0xac] sm:$0xf]
    %v2386 = vld [vmem:[#allocation11 + $0xb0] sm:$0xf]
    %v2387 = vld [vmem:[#allocation11 + $0xb4] sm:$0xf]
    %v2388 = vld [vmem:[#allocation11 + $0xb8] sm:$0xf]
    %v2389 = vld [vmem:[#allocation11 + $0xbc] sm:$0xf]
    %v2390 = vld [vmem:[#allocation11 + $0xc0] sm:$0xf]
    %v2391 = vld [vmem:[#allocation11 + $0xc4] sm:$0xf]
    %v2392 = vld [vmem:[#allocation11 + $0xc8] sm:$0xf]
    %v2393 = vld [vmem:[#allocation11 + $0xcc] sm:$0xf]
    %v2394 = vld [vmem:[#allocation11 + $0xd0] sm:$0xf]
    %v2395 = vld [vmem:[#allocation11 + $0xd4] sm:$0xf]
    %v2396 = vld [vmem:[#allocation11 + $0xd8] sm:$0xf]
    %v2397 = vld [vmem:[#allocation11 + $0xdc] sm:$0xf]
    %v2398 = vld [vmem:[#allocation11 + $0xe0] sm:$0xf]
    %v2399 = vld [vmem:[#allocation11 + $0xe4] sm:$0xf]
    %v2400 = vld [vmem:[#allocation11 + $0xe8] sm:$0xf]
    %v2401 = vld [vmem:[#allocation11 + $0xec] sm:$0xf]
    %v2402 = vld [vmem:[#allocation11 + $0xf0] sm:$0xf]
    %v2403 = vld [vmem:[#allocation11 + $0xf4] sm:$0xf]
    %v2404 = vld [vmem:[#allocation11 + $0xf8] sm:$0xf]
    %v2405 = vld [vmem:[#allocation11 + $0xfc] sm:$0xf]
    %v2406 = vld [vmem:[%s8] sm:$0x1]
    %v2408 = vlaneseq
    %v2409 = vshrl.u32 %v2408, 7
    %v2410 = vsub.s32 0, %v2409
    %v2411 = vrot.slane %v2406, %v2410
    %v2477 = vunpack.c.l.b16 %v2342
    %v2478 = vunpack.c.l.b16 %v2343
    %v2479 = vunpack.c.l.b16 %v2344
    %v2480 = vunpack.c.l.b16 %v2345
    %v2481 = vunpack.c.l.b16 %v2346
    %v2482 = vunpack.c.l.b16 %v2347
    %v2483 = vunpack.c.l.b16 %v2348
    %v2484 = vunpack.c.l.b16 %v2349
    %v2485 = vunpack.c.l.b16 %v2350
    %v2486 = vunpack.c.l.b16 %v2351
    %v2487 = vunpack.c.l.b16 %v2352
    %v2488 = vunpack.c.l.b16 %v2353
    %v2489 = vunpack.c.l.b16 %v2354
    %v2490 = vunpack.c.l.b16 %v2355
    %v2491 = vunpack.c.l.b16 %v2356
    %v2492 = vunpack.c.l.b16 %v2357
    %v2493 = vunpack.c.l.b16 %v2358
    %v2494 = vunpack.c.l.b16 %v2359
    %v2495 = vunpack.c.l.b16 %v2360
    %v2496 = vunpack.c.l.b16 %v2361
    %v2497 = vunpack.c.l.b16 %v2362
    %v2498 = vunpack.c.l.b16 %v2363
    %v2499 = vunpack.c.l.b16 %v2364
    %v2500 = vunpack.c.l.b16 %v2365
    %v2501 = vunpack.c.l.b16 %v2366
    %v2502 = vunpack.c.l.b16 %v2367
    %v2503 = vunpack.c.l.b16 %v2368
    %v2504 = vunpack.c.l.b16 %v2369
    %v2505 = vunpack.c.l.b16 %v2370
    %v2506 = vunpack.c.l.b16 %v2371
    %v2507 = vunpack.c.l.b16 %v2372
    %v2508 = vunpack.c.l.b16 %v2373
    %v2509 = vunpack.c.l.b16 %v2374
    %v2510 = vunpack.c.l.b16 %v2375
    %v2511 = vunpack.c.l.b16 %v2376
    %v2512 = vunpack.c.l.b16 %v2377
    %v2513 = vunpack.c.l.b16 %v2378
    %v2514 = vunpack.c.l.b16 %v2379
    %v2515 = vunpack.c.l.b16 %v2380
    %v2516 = vunpack.c.l.b16 %v2381
    %v2517 = vunpack.c.l.b16 %v2382
    %v2518 = vunpack.c.l.b16 %v2383
    %v2519 = vunpack.c.l.b16 %v2384
    %v2520 = vunpack.c.l.b16 %v2385
    %v2521 = vunpack.c.l.b16 %v2386
    %v2522 = vunpack.c.l.b16 %v2387
    %v2523 = vunpack.c.l.b16 %v2388
    %v2524 = vunpack.c.l.b16 %v2389
    %v2525 = vunpack.c.l.b16 %v2390
    %v2526 = vunpack.c.l.b16 %v2391
    %v2527 = vunpack.c.l.b16 %v2392
    %v2528 = vunpack.c.l.b16 %v2393
    %v2529 = vunpack.c.l.b16 %v2394
    %v2530 = vunpack.c.l.b16 %v2395
    %v2531 = vunpack.c.l.b16 %v2396
    %v2532 = vunpack.c.l.b16 %v2397
    %v2533 = vunpack.c.l.b16 %v2398
    %v2534 = vunpack.c.l.b16 %v2399
    %v2535 = vunpack.c.l.b16 %v2400
    %v2536 = vunpack.c.l.b16 %v2401
    %v2537 = vunpack.c.l.b16 %v2402
    %v2538 = vunpack.c.l.b16 %v2403
    %v2539 = vunpack.c.l.b16 %v2404
    %v2540 = vunpack.c.l.b16 %v2405
    %v2541 = vpack.c.b16 %v2478, %v2477
    %v2542 = vpack.c.b16 %v2480, %v2479
    %v2543 = vpack.c.b16 %v2482, %v2481
    %v2544 = vpack.c.b16 %v2484, %v2483
    %v2545 = vpack.c.b16 %v2486, %v2485
    %v2546 = vpack.c.b16 %v2488, %v2487
    %v2547 = vpack.c.b16 %v2490, %v2489
    %v2548 = vpack.c.b16 %v2492, %v2491
    %v2549 = vpack.c.b16 %v2494, %v2493
    %v2550 = vpack.c.b16 %v2496, %v2495
    %v2551 = vpack.c.b16 %v2498, %v2497
    %v2552 = vpack.c.b16 %v2500, %v2499
    %v2553 = vpack.c.b16 %v2502, %v2501
    %v2554 = vpack.c.b16 %v2504, %v2503
    %v2555 = vpack.c.b16 %v2506, %v2505
    %v2556 = vpack.c.b16 %v2508, %v2507
    %v2557 = vpack.c.b16 %v2510, %v2509
    %v2558 = vpack.c.b16 %v2512, %v2511
    %v2559 = vpack.c.b16 %v2514, %v2513
    %v2560 = vpack.c.b16 %v2516, %v2515
    %v2561 = vpack.c.b16 %v2518, %v2517
    %v2562 = vpack.c.b16 %v2520, %v2519
    %v2563 = vpack.c.b16 %v2522, %v2521
    %v2564 = vpack.c.b16 %v2524, %v2523
    %v2565 = vpack.c.b16 %v2526, %v2525
    %v2566 = vpack.c.b16 %v2528, %v2527
    %v2567 = vpack.c.b16 %v2530, %v2529
    %v2568 = vpack.c.b16 %v2532, %v2531
    %v2569 = vpack.c.b16 %v2534, %v2533
    %v2570 = vpack.c.b16 %v2536, %v2535
    %v2571 = vpack.c.b16 %v2538, %v2537
    %v2572 = vpack.c.b16 %v2540, %v2539
    %2605 = vmatprep.subr.bf16.mxu0 0
    %2606 = vmatpush1.bf16.msra.mxu0 %v2548
    %2607 = vmatprep.subr.bf16.mxu0 0
    %2608 = vmatpush1.bf16.msra.mxu0 %v2547
    %2609 = vmatprep.subr.bf16.mxu0 0
    %2610 = vmatpush1.bf16.msra.mxu0 %v2546
    %2611 = vmatprep.subr.bf16.mxu0 0
    %2612 = vmatpush1.bf16.msra.mxu0 %v2545
    %2613 = vmatprep.subr.bf16.mxu0 0
    %2614 = vmatpush1.bf16.msra.mxu0 %v2544
    %2615 = vmatprep.subr.bf16.mxu0 0
    %2616 = vmatpush1.bf16.msra.mxu0 %v2543
    %2617 = vmatprep.subr.bf16.mxu0 0
    %2618 = vmatpush1.bf16.msra.mxu0 %v2542
    %2619 = vmatprep.subr.bf16.mxu0 0
    %2620 = vmatpush1.bf16.msra.mxu0 %v2541
    %2621 = vmatprep.subr.bf16.mxu0 0
    %2622 = vmatpush2.bf16.msra.mxu0 %v2556
    %2623 = vmatprep.subr.bf16.mxu0 0
    %2624 = vmatpush2.bf16.msra.mxu0 %v2555
    %2625 = vmatprep.subr.bf16.mxu0 0
    %2626 = vmatpush2.bf16.msra.mxu0 %v2554
    %2627 = vmatprep.subr.bf16.mxu0 0
    %2628 = vmatpush2.bf16.msra.mxu0 %v2553
    %2629 = vmatprep.subr.bf16.mxu0 0
    %2630 = vmatpush2.bf16.msra.mxu0 %v2552
    %2631 = vmatprep.subr.bf16.mxu0 0
    %2632 = vmatpush2.bf16.msra.mxu0 %v2551
    %2633 = vmatprep.subr.bf16.mxu0 0
    %2634 = vmatpush2.bf16.msra.mxu0 %v2550
    %2635 = vmatprep.subr.bf16.mxu0 0
    %2636 = vmatpush2.bf16.msra.mxu0 %v2549
    %2637 = vmatprep.mubr.bf16.mxu0 %v2339
    %2638 = vmatmul.mubr.bf16.gmra.mxu0 %v2338
    %v2639 = vpop.f32.mrf.mxu0
    %v2640 = vadd.f32 %v2411, %v2639
    %v2641 = vpop.f32.mrf.mxu0
    %v2642 = vpop.f32.mrf.mxu0
    %v2643 = vpop.f32.mrf.mxu0
    %2644 = vdwg.mxu0
    %2645 = vmatprep.subr.bf16.mxu0 0
    %2646 = vmatpush1.bf16.msra.mxu0 %v2564
    %2647 = vmatprep.subr.bf16.mxu0 0
    %2648 = vmatpush1.bf16.msra.mxu0 %v2563
    %2649 = vmatprep.subr.bf16.mxu0 0
    %2650 = vmatpush1.bf16.msra.mxu0 %v2562
    %2651 = vmatprep.subr.bf16.mxu0 0
    %2652 = vmatpush1.bf16.msra.mxu0 %v2561
    %2653 = vmatprep.subr.bf16.mxu0 0
    %2654 = vmatpush1.bf16.msra.mxu0 %v2560
    %2655 = vmatprep.subr.bf16.mxu0 0
    %2656 = vmatpush1.bf16.msra.mxu0 %v2559
    %2657 = vmatprep.subr.bf16.mxu0 0
    %2658 = vmatpush1.bf16.msra.mxu0 %v2558
    %2659 = vmatprep.subr.bf16.mxu0 0
    %2660 = vmatpush1.bf16.msra.mxu0 %v2557
    %2661 = vmatprep.subr.bf16.mxu0 0
    %2662 = vmatpush2.bf16.msra.mxu0 %v2572
    %2663 = vmatprep.subr.bf16.mxu0 0
    %2664 = vmatpush2.bf16.msra.mxu0 %v2571
    %2665 = vmatprep.subr.bf16.mxu0 0
    %2666 = vmatpush2.bf16.msra.mxu0 %v2570
    %2667 = vmatprep.subr.bf16.mxu0 0
    %2668 = vmatpush2.bf16.msra.mxu0 %v2569
    %2669 = vmatprep.subr.bf16.mxu0 0
    %2670 = vmatpush2.bf16.msra.mxu0 %v2568
    %2671 = vmatprep.subr.bf16.mxu0 0
    %2672 = vmatpush2.bf16.msra.mxu0 %v2567
    %2673 = vmatprep.subr.bf16.mxu0 0
    %2674 = vmatpush2.bf16.msra.mxu0 %v2566
    %2675 = vmatprep.subr.bf16.mxu0 0
    %2676 = vmatpush2.bf16.msra.mxu0 %v2565
    %2677 = vmatprep.mubr.bf16.mxu0 %v2341
    %2678 = vmatmul.mubr.bf16.gmra.mxu0 %v2340
    %v2679 = vpop.f32.mrf.mxu0
    %v2680 = vadd.f32 %v2640, %v2679
    %v2681 = vpop.f32.mrf.mxu0
    %v2682 = vpop.f32.mrf.mxu0
    %v2683 = vpop.f32.mrf.mxu0
    %2684 = vdwg.mxu0
    %v2685 = vadd.f32 %v2680, %v112
    %2686 = vst [vmem:[#allocation13] sm:$0xff] %v2685
    // Predicated region
    $region62: #{tpu_custom_call.1} parent=1 // pred_check
      _
    $region63: #{tpu_custom_call.1} parent=1 // pred_check_branch
      %2688 = sbr.rel (0) target = $region65
    $region64: #{tpu_custom_call.1} parent=1 // pred_region
      %s2690 = ssub.s32 128, 128
      %2691 = vsyncadd [#allocation4], %s2690
      %s2693 = sshll.u32 [#allocation13], 4
      %s2694 = int_to_ptr.vmem [resolvable:$true] %s2693
      %2696 = dma.vmem_to_hbm [thread:$0]  %s2694, 128, %s9, [#allocation4]
    $region65: #{tpu_custom_call.1} parent=1 // pred_fallthru
      _
    // Predicated region
    $region66: #{tpu_custom_call.1} parent=1 // pred_check
      _
    $region67: #{tpu_custom_call.1} parent=1 // pred_check_branch
      %2698 = sbr.rel (0) target = $region69
    $region68: #{tpu_custom_call.1} parent=1 // pred_region
      %2699 = dma.done [#allocation4], 128
    $region69: #{tpu_custom_call.1} parent=1 // pred_fallthru
      _
    %2700 = vsyncpa [#allocation3], 1
    %2701 = vsyncpa [#allocation6], 1
    %2702 = vsyncpa [#allocation9], 1
    %2703 = vsyncpa [#allocation12], 1
    %2704 = vsyncpa [#allocation4], 1

</llo_original>
